<compile_context>
chip_gen: v5e
topology: v5e:2x2
jax: 0.10.0
libtpu: 0.0.40
codegen_flags: <defaults>
</compile_context>

<pallas_src>
import functools

import jax
import jax.numpy as jnp
from jax.experimental import pallas as pl
from jax.experimental.pallas import tpu as pltpu


def _encoder_kernel(a_ref, w0_ref, b0_ref, w1_ref, b1_ref, o_ref, *, af):
    """One batch tile of the fused 2-layer MLP encoder.

    a_ref : (TM, node_size)    VMEM (streamed over the batch grid)
    w0_ref: (node_size, nhid0) VMEM (resident across grid: constant index_map)
    b0_ref: (1, nhid0)         VMEM (resident)
    w1_ref: (nhid0, nhid1)     VMEM (resident)
    b1_ref: (1, nhid1)         VMEM (resident)
    o_ref : (TM, nhid1)        VMEM
    """
    a = a_ref[...]
    # Layer 0: MXU matmul, VPU bias add + activation, all in f32.
    h = jnp.dot(a, w0_ref[...], preferred_element_type=jnp.float32) + b0_ref[...]
    if af == "Leaky_Relu":
        h = jnp.where(h > 0, h, 0.01 * h)  # F.leaky_relu default negative_slope
    else:
        h = jax.nn.sigmoid(h)              # EUP transcendental
    # Layer 1.
    y = jnp.dot(h, w1_ref[...], preferred_element_type=jnp.float32) + b1_ref[...]
    if af == "Leaky_Relu":
        y = jnp.where(y > 0, y, 0.01 * y)
    else:
        y = jax.nn.sigmoid(y)
    # TODO(synk): lane-dense output (reshape (TM, nhid1) -> (TM*nhid1//128, 128))
    # would turn masked vst.msk into dense stores, but the minor-dim reshape is
    # not reliably lowerable; keep the (TM, nhid1) store for correctness.
    o_ref[...] = y.astype(o_ref.dtype)


# Batch-tile rows. Big tiles amortize per-grid-step overhead (~0.35us) and get
# close to HBM roofline; VMEM use stays well under 1 MiB at these widths.
_TM_MAX = 1024


def encoder_forward(A, w0, b0, w1, b1, activation_function="Leaky_Relu"):
    """Pallas TPU implementation of Encoder.forward.

    A : (B, node_size) float32
    w0: (node_size, nhid0), b0: (nhid0,)
    w1: (nhid0, nhid1),     b1: (nhid1,)
    """
    B, node_size = A.shape
    nhid0 = w0.shape[1]
    nhid1 = w1.shape[1]

    # Full batch as one block if small, else _TM_MAX-row tiles; pad the tail so
    # every grid step sees a full tile, then slice the pad off afterwards.
    tm = B if B <= _TM_MAX else _TM_MAX
    b_pad = pl.cdiv(B, tm) * tm
    a_in = A if b_pad == B else jnp.pad(A, ((0, b_pad - B), (0, 0)))
    grid = (b_pad // tm,)

    # Biases as (1, N) 2-D VMEM tiles that broadcast over rows and stay resident.
    b0_2d = b0.reshape(1, nhid0)
    b1_2d = b1.reshape(1, nhid1)

    kernel = functools.partial(_encoder_kernel, af=activation_function)

    # Streamed A / output tiles over the batch grid (auto double-buffered).
    # NOTE: on v7x a deeper pipeline (pipeline_mode=pl.Buffered(3)) on the A
    # stream can further hide DMA issue latency.
    a_spec = pl.BlockSpec((tm, node_size), lambda i: (i, 0))
    out_spec = pl.BlockSpec((tm, nhid1), lambda i: (i, 0))
    resident = lambda shape: pl.BlockSpec(shape, lambda i: (0, 0))

    transcendentals = 0 if activation_function == "Leaky_Relu" else B * (nhid0 + nhid1)
    cost = pl.CostEstimate(
        flops=2 * B * (node_size * nhid0 + nhid0 * nhid1),
        transcendentals=transcendentals,
        bytes_accessed=4 * (B * (node_size + nhid1)
                            + node_size * nhid0 + nhid0 * nhid1 + nhid0 + nhid1),
    )

    out = pl.pallas_call(
        kernel,
        out_shape=jax.ShapeDtypeStruct((b_pad, nhid1), jnp.float32),
        grid_spec=pltpu.PrefetchScalarGridSpec(
            num_scalar_prefetch=0,
            grid=grid,
            in_specs=[
                a_spec,
                resident((node_size, nhid0)),
                resident((1, nhid0)),
                resident((nhid0, nhid1)),
                resident((1, nhid1)),
            ],
            out_specs=out_spec,
        ),
        compiler_params=pltpu.CompilerParams(
            dimension_semantics=("parallel",),   # shard batch loop across TCs (v7x)
            vmem_limit_bytes=32 * 1024 * 1024,
        ),
        cost_estimate=cost,
    )(a_in, w0, b0_2d, w1, b1_2d)

    return out[:B] if b_pad != B else out


def _reference(A, w0, b0, w1, b1, af):
    if af == "Leaky_Relu":
        act = lambda x: jnp.where(x > 0, x, 0.01 * x)
    else:
        act = jax.nn.sigmoid
    h = act(A @ w0 + b0)
    return act(h @ w1 + b1)


if __name__ == "__main__":
    # Shapes consistent with Encoder(node_size, nhid0, nhid1, af); batch large
    # enough to exercise multiple grid tiles but still small.
    batch, node_size, nhid0, nhid1 = 4096, 16, 32, 8

    key = jax.random.PRNGKey(0)
    k_a, k_w0, k_b0, k_w1, k_b1 = jax.random.split(key, 5)

    A = jax.random.normal(k_a, (batch, node_size), dtype=jnp.float32)
    # Deterministic synthetic parameters (shapes from nn.Linear in __init__).
    w0 = jax.random.normal(k_w0, (node_size, nhid0), dtype=jnp.float32) * 0.1
    b0 = jax.random.normal(k_b0, (nhid0,), dtype=jnp.float32) * 0.1
    w1 = jax.random.normal(k_w1, (nhid0, nhid1), dtype=jnp.float32) * 0.1
    b1 = jax.random.normal(k_b1, (nhid1,), dtype=jnp.float32) * 0.1

    ok = True
    for af in ("Leaky_Relu", "Sigmoid"):
        # batch: exact multiple of the tile; 1500: exercises the ragged tail path.
        for nb in (batch, 1500):
            out = jax.block_until_ready(
                encoder_forward(A[:nb], w0, b0, w1, b1, activation_function=af))
            ref = _reference(A[:nb], w0, b0, w1, b1, af)
            if out.shape != ref.shape or not jnp.allclose(out, ref, atol=1e-5, rtol=1e-5):
                ok = False
                print(f"MISMATCH af={af} B={nb}: max abs err "
                      f"{float(jnp.max(jnp.abs(out - ref)))}")

    if ok:
        print("KERNEL_OK")
</pallas_src>

<mosaic_0001>
module attributes {stable_mosaic.version = 11 : i64} {
  func.func @_encoder_kernel(%arg0: i32, %arg1: memref<1024x16xf32, #tpu.memory_space<vmem>>, %arg2: memref<16x32xf32, #tpu.memory_space<vmem>>, %arg3: memref<1x32xf32, #tpu.memory_space<vmem>>, %arg4: memref<32x8xf32, #tpu.memory_space<vmem>>, %arg5: memref<1x8xf32, #tpu.memory_space<vmem>>, %arg6: memref<1024x8xf32, #tpu.memory_space<vmem>>) attributes {dimension_semantics = [#tpu.dimension_semantics<parallel>], iteration_bounds = array<i64: 4>, scalar_prefetch = 0 : i64, scratch_operands = 0 : i64, tpu.core_type = #tpu.core_type<tc>, window_params = [{transform_indices = @transform_0, window_bounds = array<i64: 1024, 16>}, {pipeline_mode = #tpu.pipeline_mode<synchronous>, transform_indices = @transform_1, window_bounds = array<i64: 16, 32>}, {pipeline_mode = #tpu.pipeline_mode<synchronous>, transform_indices = @transform_2, window_bounds = array<i64: 1, 32>}, {pipeline_mode = #tpu.pipeline_mode<synchronous>, transform_indices = @transform_3, window_bounds = array<i64: 32, 8>}, {pipeline_mode = #tpu.pipeline_mode<synchronous>, transform_indices = @transform_4, window_bounds = array<i64: 1, 8>}, {transform_indices = @transform_5, window_bounds = array<i64: 1024, 8>}]} {
    %c0 = arith.constant 0 : index
    %c0_0 = arith.constant 0 : index
    %0 = vector.load %arg1[%c0, %c0_0] : memref<1024x16xf32, #tpu.memory_space<vmem>>, vector<1024x16xf32>
    %c0_1 = arith.constant 0 : index
    %c0_2 = arith.constant 0 : index
    %1 = vector.load %arg2[%c0_1, %c0_2] : memref<16x32xf32, #tpu.memory_space<vmem>>, vector<16x32xf32>
    %cst = arith.constant dense<0.000000e+00> : vector<1024x32xf32>
    %2 = tpu.matmul %0, %1, %cst {dimension_numbers = #tpu.dot_dimension_numbers<[1], [0], [0], [1], [0, 0, 1, 1], [], []>} : vector<1024x16xf32>, vector<16x32xf32>, vector<1024x32xf32> -> vector<1024x32xf32>
    %c0_3 = arith.constant 0 : index
    %c0_4 = arith.constant 0 : index
    %3 = vector.load %arg3[%c0_3, %c0_4] : memref<1x32xf32, #tpu.memory_space<vmem>>, vector<1x32xf32>
    %4 = vector.broadcast %3 : vector<1x32xf32> to vector<1024x32xf32>
    %5 = arith.addf %2, %4 : vector<1024x32xf32>
    %cst_5 = arith.constant 0.000000e+00 : f32
    %6 = vector.broadcast %cst_5 : f32 to vector<1024x32xf32>
    %7 = arith.cmpf ogt, %5, %6 : vector<1024x32xf32>
    %cst_6 = arith.constant 0.00999999977 : f32
    %8 = vector.broadcast %cst_6 : f32 to vector<1024x32xf32>
    %9 = arith.mulf %8, %5 : vector<1024x32xf32>
    %10 = arith.select %7, %5, %9 : vector<1024x32xi1>, vector<1024x32xf32>
    %c0_7 = arith.constant 0 : index
    %c0_8 = arith.constant 0 : index
    %11 = vector.load %arg4[%c0_7, %c0_8] : memref<32x8xf32, #tpu.memory_space<vmem>>, vector<32x8xf32>
    %cst_9 = arith.constant dense<0.000000e+00> : vector<1024x8xf32>
    %12 = tpu.matmul %10, %11, %cst_9 {dimension_numbers = #tpu.dot_dimension_numbers<[1], [0], [0], [1], [0, 0, 1, 1], [], []>} : vector<1024x32xf32>, vector<32x8xf32>, vector<1024x8xf32> -> vector<1024x8xf32>
    %c0_10 = arith.constant 0 : index
    %c0_11 = arith.constant 0 : index
    %13 = vector.load %arg5[%c0_10, %c0_11] : memref<1x8xf32, #tpu.memory_space<vmem>>, vector<1x8xf32>
    %14 = vector.broadcast %13 : vector<1x8xf32> to vector<1024x8xf32>
    %15 = arith.addf %12, %14 : vector<1024x8xf32>
    %cst_12 = arith.constant 0.000000e+00 : f32
    %16 = vector.broadcast %cst_12 : f32 to vector<1024x8xf32>
    %17 = arith.cmpf ogt, %15, %16 : vector<1024x8xf32>
    %cst_13 = arith.constant 0.00999999977 : f32
    %18 = vector.broadcast %cst_13 : f32 to vector<1024x8xf32>
    %19 = arith.mulf %18, %15 : vector<1024x8xf32>
    %20 = arith.select %17, %15, %19 : vector<1024x8xi1>, vector<1024x8xf32>
    %c0_14 = arith.constant 0 : index
    %c0_15 = arith.constant 0 : index
    %21 = vector.load %arg6[%c0_14, %c0_15] : memref<1024x8xf32, #tpu.memory_space<vmem>>, vector<1024x8xf32>
    tpu.vector_store %arg6[%c0_14, %c0_15], %20 {strides = array<i32>} : memref<1024x8xf32, #tpu.memory_space<vmem>>, vector<1024x8xf32>,
    return
  }
  func.func @transform_0(%arg0: i32) -> (i32, i32) {
    %c0_i32 = arith.constant 0 : i32
    %c0_i32_0 = arith.constant 0 : i32
    return %arg0, %c0_i32 : i32, i32
  }
  func.func @transform_1(%arg0: i32) -> (i32, i32) {
    %c0_i32 = arith.constant 0 : i32
    %c0_i32_0 = arith.constant 0 : i32
    %c0_i32_1 = arith.constant 0 : i32
    return %c0_i32, %c0_i32_0 : i32, i32
  }
  func.func @transform_2(%arg0: i32) -> (i32, i32) {
    %c0_i32 = arith.constant 0 : i32
    %c0_i32_0 = arith.constant 0 : i32
    %c0_i32_1 = arith.constant 0 : i32
    return %c0_i32, %c0_i32_0 : i32, i32
  }
  func.func @transform_3(%arg0: i32) -> (i32, i32) {
    %c0_i32 = arith.constant 0 : i32
    %c0_i32_0 = arith.constant 0 : i32
    %c0_i32_1 = arith.constant 0 : i32
    return %c0_i32, %c0_i32_0 : i32, i32
  }
  func.func @transform_4(%arg0: i32) -> (i32, i32) {
    %c0_i32 = arith.constant 0 : i32
    %c0_i32_0 = arith.constant 0 : i32
    %c0_i32_1 = arith.constant 0 : i32
    return %c0_i32, %c0_i32_0 : i32, i32
  }
  func.func @transform_5(%arg0: i32) -> (i32, i32) {
    %c0_i32 = arith.constant 0 : i32
    %c0_i32_0 = arith.constant 0 : i32
    return %arg0, %c0_i32 : i32, i32
  }
}

</mosaic_0001>

<llo_original>
// kernel: tpu_custom_call.1
$region0: #{tpu_custom_call.1}
  #allocation0 [shape = 'u32[]', space=smem, size = 0x4, offset = 0x4, fixed_abs, tag = 'smem constant byte address 0x4 - core index']
  #allocation1 [shape = 'u32[72,128]{1,0:T(1,128)}', space=vmem, size = 0x9000, scoped, tag = 'internal scratch']
  %s0 = inlined_call_operand.vmem [shape: f32[4096,16], index: 0, kind: input, shape index: {}]
  %s1 = inlined_call_operand.vmem [shape: f32[16,32], index: 1, kind: input, shape index: {}]
  %s2 = inlined_call_operand.vmem [shape: f32[1,32], index: 2, kind: input, shape index: {}]
  %s3 = inlined_call_operand.vmem [shape: f32[32,8], index: 3, kind: input, shape index: {}]
  %s4 = inlined_call_operand.vmem [shape: f32[1,8], index: 4, kind: input, shape index: {}]
  %s5 = inlined_call_operand.vmem [shape: f32[4096,8], index: 5, kind: output, shape index: {}]
  %s6 = sld [smem:[#allocation0]]
  $region53: #{tpu_custom_call.1} parent=0
    _
  %s8 = ssub.s32 1, %s6
  %s9 = scalar_select 0, %s8, %s6
  loop: start=0, step=1, limit=6
  $region2: #{tpu_custom_call.1} parent=0 // loop_pre_header
    _
  $region3: #{tpu_custom_call.1} parent=0 // loop_header
    %s11 = sphi 0, %s15
    %p12 = scmp.ge.s32.totalorder %s11, 6
    %s21 = sphi 0, %s23
    %s24 = sphi 0, %s21
    %s25 = sphi 0, %s24
    %s41 = sphi 0, %s25
    %s45 = sphi 0, %s45
    %s47 = sphi 0, %s45
    %s48 = sphi 0, %s47
    %s62 = sphi 0, %s48
    %s66 = sphi 0, %s66
    %s68 = sphi 0, %s66
    %s69 = sphi 0, %s68
    %s83 = sphi 0, %s69
    %s87 = sphi 0, %s87
    %s89 = sphi 0, %s87
    %s90 = sphi 0, %s89
    %s104 = sphi 0, %s90
    %s108 = sphi 0, %s108
    %s110 = sphi 0, %s108
    %s111 = sphi 0, %s110
    %s125 = sphi 0, %s111
    %s131 = sphi 0, %s133
    %s134 = sphi 0, %s131
    %s135 = sphi 0, %s134
    %s151 = sphi 0, %s135
  $region4: #{tpu_custom_call.1} parent=0 // loop_header_branch
    %14 = sbr.rel (%p12) target = $region8
  $region5: #{tpu_custom_call.1} parent=0 // loop_body
    %s16 = ssub.s32 %s11, 1
    %s17 = ssub.s32 %s11, 2
    %s18 = sadd.s32 %s11, 1
    %s19 = ssub.s32 %s11, %s18
    %p20 = scmp.eq.s32.totalorder %s19, 0
    %s22 = sadd.s32 %s21, 1
    %s23 = scalar_select %p20, %s21, %s22
    %p26 = pneg %p20
    %p27 = scmp.eq.s32.totalorder %s11, 3
    %p28 = por %p26, %p27
    %p29 = scmp.ne.s32.totalorder %s21, %s24
    %p30 = scmp.eq.s32.totalorder %s11, 0
    %p31 = por %p29, %p30
    %p32 = scmp.ne.s32.totalorder %s21, %s24
    %p33 = scmp.eq.s32.totalorder %s16, 3
    %p34 = por %p32, %p33
    %p35 = scmp.ne.s32.totalorder %s24, %s25
    %p36 = scmp.eq.s32.totalorder %s16, 0
    %p37 = por %p35, %p36
    %p38 = scmp.ne.s32.totalorder %s24, %s25
    %p39 = scmp.eq.s32.totalorder %s17, 3
    %p40 = por %p38, %p39
    %p42 = scmp.ne.s32.totalorder %s25, %s41
    %p43 = scmp.eq.s32.totalorder %s17, 0
    %p44 = por %p42, %p43
    %s46 = sadd.s32 %s45, 1
    %p49 = scmp.eq.s32.totalorder %s11, 3
    %p50 = scmp.ne.s32.totalorder %s45, %s47
    %p51 = scmp.eq.s32.totalorder %s11, 0
    %p52 = por %p50, %p51
    %p53 = scmp.ne.s32.totalorder %s45, %s47
    %p54 = scmp.eq.s32.totalorder %s16, 3
    %p55 = por %p53, %p54
    %p56 = scmp.ne.s32.totalorder %s47, %s48
    %p57 = scmp.eq.s32.totalorder %s16, 0
    %p58 = por %p56, %p57
    %p59 = scmp.ne.s32.totalorder %s47, %s48
    %p60 = scmp.eq.s32.totalorder %s17, 3
    %p61 = por %p59, %p60
    %p63 = scmp.ne.s32.totalorder %s48, %s62
    %p64 = scmp.eq.s32.totalorder %s17, 0
    %p65 = por %p63, %p64
    %s67 = sadd.s32 %s66, 1
    %p70 = scmp.eq.s32.totalorder %s11, 3
    %p71 = scmp.ne.s32.totalorder %s66, %s68
    %p72 = scmp.eq.s32.totalorder %s11, 0
    %p73 = por %p71, %p72
    %p74 = scmp.ne.s32.totalorder %s66, %s68
    %p75 = scmp.eq.s32.totalorder %s16, 3
    %p76 = por %p74, %p75
    %p77 = scmp.ne.s32.totalorder %s68, %s69
    %p78 = scmp.eq.s32.totalorder %s16, 0
    %p79 = por %p77, %p78
    %p80 = scmp.ne.s32.totalorder %s68, %s69
    %p81 = scmp.eq.s32.totalorder %s17, 3
    %p82 = por %p80, %p81
    %p84 = scmp.ne.s32.totalorder %s69, %s83
    %p85 = scmp.eq.s32.totalorder %s17, 0
    %p86 = por %p84, %p85
    %s88 = sadd.s32 %s87, 1
    %p91 = scmp.eq.s32.totalorder %s11, 3
    %p92 = scmp.ne.s32.totalorder %s87, %s89
    %p93 = scmp.eq.s32.totalorder %s11, 0
    %p94 = por %p92, %p93
    %p95 = scmp.ne.s32.totalorder %s87, %s89
    %p96 = scmp.eq.s32.totalorder %s16, 3
    %p97 = por %p95, %p96
    %p98 = scmp.ne.s32.totalorder %s89, %s90
    %p99 = scmp.eq.s32.totalorder %s16, 0
    %p100 = por %p98, %p99
    %p101 = scmp.ne.s32.totalorder %s89, %s90
    %p102 = scmp.eq.s32.totalorder %s17, 3
    %p103 = por %p101, %p102
    %p105 = scmp.ne.s32.totalorder %s90, %s104
    %p106 = scmp.eq.s32.totalorder %s17, 0
    %p107 = por %p105, %p106
    %s109 = sadd.s32 %s108, 1
    %p112 = scmp.eq.s32.totalorder %s11, 3
    %p113 = scmp.ne.s32.totalorder %s108, %s110
    %p114 = scmp.eq.s32.totalorder %s11, 0
    %p115 = por %p113, %p114
    %p116 = scmp.ne.s32.totalorder %s108, %s110
    %p117 = scmp.eq.s32.totalorder %s16, 3
    %p118 = por %p116, %p117
    %p119 = scmp.ne.s32.totalorder %s110, %s111
    %p120 = scmp.eq.s32.totalorder %s16, 0
    %p121 = por %p119, %p120
    %p122 = scmp.ne.s32.totalorder %s110, %s111
    %p123 = scmp.eq.s32.totalorder %s17, 3
    %p124 = por %p122, %p123
    %p126 = scmp.ne.s32.totalorder %s111, %s125
    %p127 = scmp.eq.s32.totalorder %s17, 0
    %p128 = por %p126, %p127
    %s129 = ssub.s32 %s11, %s18
    %p130 = scmp.eq.s32.totalorder %s129, 0
    %s132 = sadd.s32 %s131, 1
    %s133 = scalar_select %p130, %s131, %s132
    %p136 = pneg %p130
    %p137 = scmp.eq.s32.totalorder %s11, 3
    %p138 = por %p136, %p137
    %p139 = scmp.ne.s32.totalorder %s131, %s134
    %p140 = scmp.eq.s32.totalorder %s11, 0
    %p141 = por %p139, %p140
    %p142 = scmp.ne.s32.totalorder %s131, %s134
    %p143 = scmp.eq.s32.totalorder %s16, 3
    %p144 = por %p142, %p143
    %p145 = scmp.ne.s32.totalorder %s134, %s135
    %p146 = scmp.eq.s32.totalorder %s16, 0
    %p147 = por %p145, %p146
    %p148 = scmp.ne.s32.totalorder %s134, %s135
    %p149 = scmp.eq.s32.totalorder %s17, 3
    %p150 = por %p148, %p149
    %p152 = scmp.ne.s32.totalorder %s135, %s151
    %p153 = scmp.eq.s32.totalorder %s17, 0
    %p154 = por %p152, %p153
    %p155 = scmp.le.s32.totalorder 1, %s11
    %p156 = scmp.lt.s32.totalorder %s11, 5
    %p157 = pnand %p155, %p156
    %p158 = pneg %p157
    // Predicated region
    $region9: #{tpu_custom_call.1} parent=5 // pred_check
      _
    $region10: #{tpu_custom_call.1} parent=5 // pred_check_branch
      %160 = sbr.rel (%p157) target = $region12
    $region11: #{tpu_custom_call.1} parent=5 // pred_region
      %s161 = ssub.s32 %s11, 1
      // Predicated region
      $region13: #{tpu_custom_call.1} parent=11 // pred_check
        %p162 = pneg %p58
      $region14: #{tpu_custom_call.1} parent=11 // pred_check_branch
        %164 = sbr.rel (%p162) target = $region16
      $region15: #{tpu_custom_call.1} parent=11 // pred_region
        _
      $region16: #{tpu_custom_call.1} parent=11 // pred_fallthru
        _
      // Predicated region
      $region17: #{tpu_custom_call.1} parent=11 // pred_check
        %p165 = pneg %p79
      $region18: #{tpu_custom_call.1} parent=11 // pred_check_branch
        %167 = sbr.rel (%p165) target = $region20
      $region19: #{tpu_custom_call.1} parent=11 // pred_region
        _
      $region20: #{tpu_custom_call.1} parent=11 // pred_fallthru
        _
      // Predicated region
      $region21: #{tpu_custom_call.1} parent=11 // pred_check
        %p168 = pneg %p100
      $region22: #{tpu_custom_call.1} parent=11 // pred_check_branch
        %170 = sbr.rel (%p168) target = $region24
      $region23: #{tpu_custom_call.1} parent=11 // pred_region
        _
      $region24: #{tpu_custom_call.1} parent=11 // pred_fallthru
        _
      // Predicated region
      $region25: #{tpu_custom_call.1} parent=11 // pred_check
        %p171 = pneg %p121
      $region26: #{tpu_custom_call.1} parent=11 // pred_check_branch
        %173 = sbr.rel (%p171) target = $region28
      $region27: #{tpu_custom_call.1} parent=11 // pred_region
        _
      $region28: #{tpu_custom_call.1} parent=11 // pred_fallthru
        _
    $region12: #{tpu_custom_call.1} parent=5 // pred_fallthru
      _
    %p174 = scmp.lt.s32.totalorder %s11, 4
    // Predicated region
    $region29: #{tpu_custom_call.1} parent=5 // pred_check
      %p175 = pneg %p174
    $region30: #{tpu_custom_call.1} parent=5 // pred_check_branch
      %177 = sbr.rel (%p175) target = $region32
    $region31: #{tpu_custom_call.1} parent=5 // pred_region
      // Predicated region
      $region33: #{tpu_custom_call.1} parent=31 // pred_check
        %p178 = pneg %p31
      $region34: #{tpu_custom_call.1} parent=31 // pred_check_branch
        %180 = sbr.rel (%p178) target = $region36
      $region35: #{tpu_custom_call.1} parent=31 // pred_region
        %s181 = smul.u32 128, %s11
        %p182 = scmp.lt.s32.totalorder %s181, 511
        %s183 = scalar_select %p182, %s181, 511
        %s184 = smul.addr %s183, 8
        %s185 = scalar_lea.vmem %s0, %s184
        %s186 = smul.u32 128, %s11
      $region36: #{tpu_custom_call.1} parent=31 // pred_fallthru
        _
    $region32: #{tpu_custom_call.1} parent=5 // pred_fallthru
      _
    %p187 = scmp.le.s32.totalorder 1, %s11
    %p188 = scmp.lt.s32.totalorder %s11, 5
    %p189 = pnand %p187, %p188
    %p190 = pneg %p189
    // Predicated region
    $region37: #{tpu_custom_call.1} parent=5 // pred_check
      _
    $region38: #{tpu_custom_call.1} parent=5 // pred_check_branch
      %192 = sbr.rel (%p189) target = $region40
    $region39: #{tpu_custom_call.1} parent=5 // pred_region
      %s193 = ssub.s32 %s11, 1
      %s194 = smul.u32 128, %s16
      %p195 = scmp.lt.s32.totalorder %s194, 511
      %s196 = scalar_select %p195, %s194, 511
      %s197 = smul.addr %s196, 8
      %s198 = scalar_lea.vmem %s0, %s197
      %p199 = pneg %p37
      %p200 = pneg %p34
      %p201 = pneg %p58
      %p202 = pneg %p55
      %p203 = pneg %p79
      %p204 = pneg %p76
      %p205 = pneg %p100
      %p206 = pneg %p97
      %p207 = pneg %p121
      %p208 = pneg %p118
      %p209 = pneg %p147
      %p210 = pneg %p144
      %s211 = smul.u32 128, %s16
      %p212 = scmp.lt.s32.totalorder %s211, 511
      %s213 = scalar_select %p212, %s211, 511
      %s214 = smul.addr %s213, 8
      %s215 = scalar_lea.vmem %s5, %s214
      %s216 = smul.u32 128, %s16
      %p217 = scmp.lt.s32.totalorder %s216, 511
      %s218 = scalar_select %p217, %s216, 511
      %s219 = smul.addr %s218, 8
      %s220 = scalar_lea.vmem %s0, %s219
      %s221 = smul.u32 128, %s16
      %s222 = smul.u32 128, %s16
      %p223 = scmp.lt.s32.totalorder %s222, 511
      %s224 = scalar_select %p223, %s222, 511
      %s225 = smul.addr %s224, 8
      %s226 = scalar_lea.vmem %s5, %s225
      %s227 = smul.u32 128, %s16
      %v228 = vld [vmem:[%s220] sm:$0xff]
      %v229 = vld [vmem:[%s220 + $0x8] sm:$0xff]
      %v230 = vld [vmem:[%s220 + $0x10] sm:$0xff]
      %v231 = vld [vmem:[%s220 + $0x18] sm:$0xff]
      %v232 = vld [vmem:[%s220 + $0x20] sm:$0xff]
      %v233 = vld [vmem:[%s220 + $0x28] sm:$0xff]
      %v234 = vld [vmem:[%s220 + $0x30] sm:$0xff]
      %v235 = vld [vmem:[%s220 + $0x38] sm:$0xff]
      %v236 = vld [vmem:[%s220 + $0x40] sm:$0xff]
      %v237 = vld [vmem:[%s220 + $0x48] sm:$0xff]
      %v238 = vld [vmem:[%s220 + $0x50] sm:$0xff]
      %v239 = vld [vmem:[%s220 + $0x58] sm:$0xff]
      %v240 = vld [vmem:[%s220 + $0x60] sm:$0xff]
      %v241 = vld [vmem:[%s220 + $0x68] sm:$0xff]
      %v242 = vld [vmem:[%s220 + $0x70] sm:$0xff]
      %v243 = vld [vmem:[%s220 + $0x78] sm:$0xff]
      %v244 = vld [vmem:[%s220 + $0x80] sm:$0xff]
      %v245 = vld [vmem:[%s220 + $0x88] sm:$0xff]
      %v246 = vld [vmem:[%s220 + $0x90] sm:$0xff]
      %v247 = vld [vmem:[%s220 + $0x98] sm:$0xff]
      %v248 = vld [vmem:[%s220 + $0xa0] sm:$0xff]
      %v249 = vld [vmem:[%s220 + $0xa8] sm:$0xff]
      %v250 = vld [vmem:[%s220 + $0xb0] sm:$0xff]
      %v251 = vld [vmem:[%s220 + $0xb8] sm:$0xff]
      %v252 = vld [vmem:[%s220 + $0xc0] sm:$0xff]
      %v253 = vld [vmem:[%s220 + $0xc8] sm:$0xff]
      %v254 = vld [vmem:[%s220 + $0xd0] sm:$0xff]
      %v255 = vld [vmem:[%s220 + $0xd8] sm:$0xff]
      %v256 = vld [vmem:[%s220 + $0xe0] sm:$0xff]
      %v257 = vld [vmem:[%s220 + $0xe8] sm:$0xff]
      %v258 = vld [vmem:[%s220 + $0xf0] sm:$0xff]
      %v259 = vld [vmem:[%s220 + $0xf8] sm:$0xff]
      %v260 = vld [vmem:[%s220 + $0x100] sm:$0xff]
      %v261 = vld [vmem:[%s220 + $0x108] sm:$0xff]
      %v262 = vld [vmem:[%s220 + $0x110] sm:$0xff]
      %v263 = vld [vmem:[%s220 + $0x118] sm:$0xff]
      %v264 = vld [vmem:[%s220 + $0x120] sm:$0xff]
      %v265 = vld [vmem:[%s220 + $0x128] sm:$0xff]
      %v266 = vld [vmem:[%s220 + $0x130] sm:$0xff]
      %v267 = vld [vmem:[%s220 + $0x138] sm:$0xff]
      %v268 = vld [vmem:[%s220 + $0x140] sm:$0xff]
      %v269 = vld [vmem:[%s220 + $0x148] sm:$0xff]
      %v270 = vld [vmem:[%s220 + $0x150] sm:$0xff]
      %v271 = vld [vmem:[%s220 + $0x158] sm:$0xff]
      %v272 = vld [vmem:[%s220 + $0x160] sm:$0xff]
      %v273 = vld [vmem:[%s220 + $0x168] sm:$0xff]
      %v274 = vld [vmem:[%s220 + $0x170] sm:$0xff]
      %v275 = vld [vmem:[%s220 + $0x178] sm:$0xff]
      %v276 = vld [vmem:[%s220 + $0x180] sm:$0xff]
      %v277 = vld [vmem:[%s220 + $0x188] sm:$0xff]
      %v278 = vld [vmem:[%s220 + $0x190] sm:$0xff]
      %v279 = vld [vmem:[%s220 + $0x198] sm:$0xff]
      %v280 = vld [vmem:[%s220 + $0x1a0] sm:$0xff]
      %v281 = vld [vmem:[%s220 + $0x1a8] sm:$0xff]
      %v282 = vld [vmem:[%s220 + $0x1b0] sm:$0xff]
      %v283 = vld [vmem:[%s220 + $0x1b8] sm:$0xff]
      %v284 = vld [vmem:[%s220 + $0x1c0] sm:$0xff]
      %v285 = vld [vmem:[%s220 + $0x1c8] sm:$0xff]
      %v286 = vld [vmem:[%s220 + $0x1d0] sm:$0xff]
      %v287 = vld [vmem:[%s220 + $0x1d8] sm:$0xff]
      %v288 = vld [vmem:[%s220 + $0x1e0] sm:$0xff]
      %v289 = vld [vmem:[%s220 + $0x1e8] sm:$0xff]
      %v290 = vld [vmem:[%s220 + $0x1f0] sm:$0xff]
      %v291 = vld [vmem:[%s220 + $0x1f8] sm:$0xff]
      %v292 = vld [vmem:[%s220 + $0x200] sm:$0xff]
      %v293 = vld [vmem:[%s220 + $0x208] sm:$0xff]
      %v294 = vld [vmem:[%s220 + $0x210] sm:$0xff]
      %v295 = vld [vmem:[%s220 + $0x218] sm:$0xff]
      %v296 = vld [vmem:[%s220 + $0x220] sm:$0xff]
      %v297 = vld [vmem:[%s220 + $0x228] sm:$0xff]
      %v298 = vld [vmem:[%s220 + $0x230] sm:$0xff]
      %v299 = vld [vmem:[%s220 + $0x238] sm:$0xff]
      %v300 = vld [vmem:[%s220 + $0x240] sm:$0xff]
      %v301 = vld [vmem:[%s220 + $0x248] sm:$0xff]
      %v302 = vld [vmem:[%s220 + $0x250] sm:$0xff]
      %v303 = vld [vmem:[%s220 + $0x258] sm:$0xff]
      %v304 = vld [vmem:[%s220 + $0x260] sm:$0xff]
      %v305 = vld [vmem:[%s220 + $0x268] sm:$0xff]
      %v306 = vld [vmem:[%s220 + $0x270] sm:$0xff]
      %v307 = vld [vmem:[%s220 + $0x278] sm:$0xff]
      %v308 = vld [vmem:[%s220 + $0x280] sm:$0xff]
      %v309 = vld [vmem:[%s220 + $0x288] sm:$0xff]
      %v310 = vld [vmem:[%s220 + $0x290] sm:$0xff]
      %v311 = vld [vmem:[%s220 + $0x298] sm:$0xff]
      %v312 = vld [vmem:[%s220 + $0x2a0] sm:$0xff]
      %v313 = vld [vmem:[%s220 + $0x2a8] sm:$0xff]
      %v314 = vld [vmem:[%s220 + $0x2b0] sm:$0xff]
      %v315 = vld [vmem:[%s220 + $0x2b8] sm:$0xff]
      %v316 = vld [vmem:[%s220 + $0x2c0] sm:$0xff]
      %v317 = vld [vmem:[%s220 + $0x2c8] sm:$0xff]
      %v318 = vld [vmem:[%s220 + $0x2d0] sm:$0xff]
      %v319 = vld [vmem:[%s220 + $0x2d8] sm:$0xff]
      %v320 = vld [vmem:[%s220 + $0x2e0] sm:$0xff]
      %v321 = vld [vmem:[%s220 + $0x2e8] sm:$0xff]
      %v322 = vld [vmem:[%s220 + $0x2f0] sm:$0xff]
      %v323 = vld [vmem:[%s220 + $0x2f8] sm:$0xff]
      %v324 = vld [vmem:[%s220 + $0x300] sm:$0xff]
      %v325 = vld [vmem:[%s220 + $0x308] sm:$0xff]
      %v326 = vld [vmem:[%s220 + $0x310] sm:$0xff]
      %v327 = vld [vmem:[%s220 + $0x318] sm:$0xff]
      %v328 = vld [vmem:[%s220 + $0x320] sm:$0xff]
      %v329 = vld [vmem:[%s220 + $0x328] sm:$0xff]
      %v330 = vld [vmem:[%s220 + $0x330] sm:$0xff]
      %v331 = vld [vmem:[%s220 + $0x338] sm:$0xff]
      %v332 = vld [vmem:[%s220 + $0x340] sm:$0xff]
      %v333 = vld [vmem:[%s220 + $0x348] sm:$0xff]
      %v334 = vld [vmem:[%s220 + $0x350] sm:$0xff]
      %v335 = vld [vmem:[%s220 + $0x358] sm:$0xff]
      %v336 = vld [vmem:[%s220 + $0x360] sm:$0xff]
      %v337 = vld [vmem:[%s220 + $0x368] sm:$0xff]
      %v338 = vld [vmem:[%s220 + $0x370] sm:$0xff]
      %v339 = vld [vmem:[%s220 + $0x378] sm:$0xff]
      %v340 = vld [vmem:[%s220 + $0x380] sm:$0xff]
      %v341 = vld [vmem:[%s220 + $0x388] sm:$0xff]
      %v342 = vld [vmem:[%s220 + $0x390] sm:$0xff]
      %v343 = vld [vmem:[%s220 + $0x398] sm:$0xff]
      %v344 = vld [vmem:[%s220 + $0x3a0] sm:$0xff]
      %v345 = vld [vmem:[%s220 + $0x3a8] sm:$0xff]
      %v346 = vld [vmem:[%s220 + $0x3b0] sm:$0xff]
      %v347 = vld [vmem:[%s220 + $0x3b8] sm:$0xff]
      %v348 = vld [vmem:[%s220 + $0x3c0] sm:$0xff]
      %v349 = vld [vmem:[%s220 + $0x3c8] sm:$0xff]
      %v350 = vld [vmem:[%s220 + $0x3d0] sm:$0xff]
      %v351 = vld [vmem:[%s220 + $0x3d8] sm:$0xff]
      %v352 = vld [vmem:[%s220 + $0x3e0] sm:$0xff]
      %v353 = vld [vmem:[%s220 + $0x3e8] sm:$0xff]
      %v354 = vld [vmem:[%s220 + $0x3f0] sm:$0xff]
      %v355 = vld [vmem:[%s220 + $0x3f8] sm:$0xff]
      %v356 = vld [vmem:[%s1] sm:$0xff]
      %v357 = vld [vmem:[%s1 + $0x8] sm:$0xff]
      %v358 = vld [vmem:[%s2] sm:$0x1]
      %v360 = vperm.slane %v358, 0
      %vm362 = vcmask 130048
      %v364 = vsel %vm362, %v228, 0
      %v367 = vsel %vm362, %v229, 0
      %v370 = vsel %vm362, %v230, 0
      %v373 = vsel %vm362, %v231, 0
      %v376 = vsel %vm362, %v232, 0
      %v379 = vsel %vm362, %v233, 0
      %v382 = vsel %vm362, %v234, 0
      %v385 = vsel %vm362, %v235, 0
      %v388 = vsel %vm362, %v236, 0
      %v391 = vsel %vm362, %v237, 0
      %v394 = vsel %vm362, %v238, 0
      %v397 = vsel %vm362, %v239, 0
      %v400 = vsel %vm362, %v240, 0
      %v403 = vsel %vm362, %v241, 0
      %v406 = vsel %vm362, %v242, 0
      %v409 = vsel %vm362, %v243, 0
      %v412 = vsel %vm362, %v244, 0
      %v415 = vsel %vm362, %v245, 0
      %v418 = vsel %vm362, %v246, 0
      %v421 = vsel %vm362, %v247, 0
      %v424 = vsel %vm362, %v248, 0
      %v427 = vsel %vm362, %v249, 0
      %v430 = vsel %vm362, %v250, 0
      %v433 = vsel %vm362, %v251, 0
      %v436 = vsel %vm362, %v252, 0
      %v439 = vsel %vm362, %v253, 0
      %v442 = vsel %vm362, %v254, 0
      %v445 = vsel %vm362, %v255, 0
      %v448 = vsel %vm362, %v256, 0
      %v451 = vsel %vm362, %v257, 0
      %v454 = vsel %vm362, %v258, 0
      %v457 = vsel %vm362, %v259, 0
      %v460 = vsel %vm362, %v260, 0
      %v463 = vsel %vm362, %v261, 0
      %v466 = vsel %vm362, %v262, 0
      %v469 = vsel %vm362, %v263, 0
      %v472 = vsel %vm362, %v264, 0
      %v475 = vsel %vm362, %v265, 0
      %v478 = vsel %vm362, %v266, 0
      %v481 = vsel %vm362, %v267, 0
      %v484 = vsel %vm362, %v268, 0
      %v487 = vsel %vm362, %v269, 0
      %v490 = vsel %vm362, %v270, 0
      %v493 = vsel %vm362, %v271, 0
      %v496 = vsel %vm362, %v272, 0
      %v499 = vsel %vm362, %v273, 0
      %v502 = vsel %vm362, %v274, 0
      %v505 = vsel %vm362, %v275, 0
      %v508 = vsel %vm362, %v276, 0
      %v511 = vsel %vm362, %v277, 0
      %v514 = vsel %vm362, %v278, 0
      %v517 = vsel %vm362, %v279, 0
      %v520 = vsel %vm362, %v280, 0
      %v523 = vsel %vm362, %v281, 0
      %v526 = vsel %vm362, %v282, 0
      %v529 = vsel %vm362, %v283, 0
      %v532 = vsel %vm362, %v284, 0
      %v535 = vsel %vm362, %v285, 0
      %v538 = vsel %vm362, %v286, 0
      %v541 = vsel %vm362, %v287, 0
      %v544 = vsel %vm362, %v288, 0
      %v547 = vsel %vm362, %v289, 0
      %v550 = vsel %vm362, %v290, 0
      %v553 = vsel %vm362, %v291, 0
      %v556 = vsel %vm362, %v292, 0
      %v559 = vsel %vm362, %v293, 0
      %v562 = vsel %vm362, %v294, 0
      %v565 = vsel %vm362, %v295, 0
      %v568 = vsel %vm362, %v296, 0
      %v571 = vsel %vm362, %v297, 0
      %v574 = vsel %vm362, %v298, 0
      %v577 = vsel %vm362, %v299, 0
      %v580 = vsel %vm362, %v300, 0
      %v583 = vsel %vm362, %v301, 0
      %v586 = vsel %vm362, %v302, 0
      %v589 = vsel %vm362, %v303, 0
      %v592 = vsel %vm362, %v304, 0
      %v595 = vsel %vm362, %v305, 0
      %v598 = vsel %vm362, %v306, 0
      %v601 = vsel %vm362, %v307, 0
      %v604 = vsel %vm362, %v308, 0
      %v607 = vsel %vm362, %v309, 0
      %v610 = vsel %vm362, %v310, 0
      %v613 = vsel %vm362, %v311, 0
      %v616 = vsel %vm362, %v312, 0
      %v619 = vsel %vm362, %v313, 0
      %v622 = vsel %vm362, %v314, 0
      %v625 = vsel %vm362, %v315, 0
      %v628 = vsel %vm362, %v316, 0
      %v631 = vsel %vm362, %v317, 0
      %v634 = vsel %vm362, %v318, 0
      %v637 = vsel %vm362, %v319, 0
      %v640 = vsel %vm362, %v320, 0
      %v643 = vsel %vm362, %v321, 0
      %v646 = vsel %vm362, %v322, 0
      %v649 = vsel %vm362, %v323, 0
      %v652 = vsel %vm362, %v324, 0
      %v655 = vsel %vm362, %v325, 0
      %v658 = vsel %vm362, %v326, 0
      %v661 = vsel %vm362, %v327, 0
      %v664 = vsel %vm362, %v328, 0
      %v667 = vsel %vm362, %v329, 0
      %v670 = vsel %vm362, %v330, 0
      %v673 = vsel %vm362, %v331, 0
      %v676 = vsel %vm362, %v332, 0
      %v679 = vsel %vm362, %v333, 0
      %v682 = vsel %vm362, %v334, 0
      %v685 = vsel %vm362, %v335, 0
      %v688 = vsel %vm362, %v336, 0
      %v691 = vsel %vm362, %v337, 0
      %v694 = vsel %vm362, %v338, 0
      %v697 = vsel %vm362, %v339, 0
      %v700 = vsel %vm362, %v340, 0
      %v703 = vsel %vm362, %v341, 0
      %v706 = vsel %vm362, %v342, 0
      %v709 = vsel %vm362, %v343, 0
      %v712 = vsel %vm362, %v344, 0
      %v715 = vsel %vm362, %v345, 0
      %v718 = vsel %vm362, %v346, 0
      %v721 = vsel %vm362, %v347, 0
      %v724 = vsel %vm362, %v348, 0
      %v727 = vsel %vm362, %v349, 0
      %v730 = vsel %vm362, %v350, 0
      %v733 = vsel %vm362, %v351, 0
      %v736 = vsel %vm362, %v352, 0
      %v739 = vsel %vm362, %v353, 0
      %v742 = vsel %vm362, %v354, 0
      %v745 = vsel %vm362, %v355, 0
      %747 = vmatpush.msra.mxu0 0.0
      %748 = vmatpush.msra.mxu0 0.0
      %749 = vmatpush.msra.mxu0 0.0
      %750 = vmatpush.msra.mxu0 0.0
      %751 = vmatpush.msra.mxu0 0.0
      %752 = vmatpush.msra.mxu0 0.0
      %753 = vmatpush.msra.mxu0 0.0
      %754 = vmatpush.msra.mxu0 0.0
      %755 = vmatpush.msra.mxu0 0.0
      %756 = vmatpush.msra.mxu0 0.0
      %757 = vmatpush.msra.mxu0 0.0
      %758 = vmatpush.msra.mxu0 0.0
      %759 = vmatpush.msra.mxu0 0.0
      %760 = vmatpush.msra.mxu0 0.0
      %761 = vmatpush.msra.mxu0 %v357
      %762 = vmatpush.msra.mxu0 %v356
      %763 = vmatmul.f32.gmra.mxu0 %v364
      %v764 = vpop.f32.mrf.mxu0
      %v765 = vadd.f32 %v360, %v764
      %766 = vmatmul.f32.gmra.mxu0 %v367
      %v767 = vpop.f32.mrf.mxu0
      %v768 = vadd.f32 %v360, %v767
      %769 = vmatmul.f32.gmra.mxu0 %v370
      %v770 = vpop.f32.mrf.mxu0
      %v771 = vadd.f32 %v360, %v770
      %772 = vmatmul.f32.gmra.mxu0 %v373
      %v773 = vpop.f32.mrf.mxu0
      %v774 = vadd.f32 %v360, %v773
      %775 = vmatmul.f32.gmra.mxu0 %v376
      %v776 = vpop.f32.mrf.mxu0
      %v777 = vadd.f32 %v360, %v776
      %778 = vmatmul.f32.gmra.mxu0 %v379
      %v779 = vpop.f32.mrf.mxu0
      %v780 = vadd.f32 %v360, %v779
      %781 = vmatmul.f32.gmra.mxu0 %v382
      %v782 = vpop.f32.mrf.mxu0
      %v783 = vadd.f32 %v360, %v782
      %784 = vmatmul.f32.gmra.mxu0 %v385
      %v785 = vpop.f32.mrf.mxu0
      %v786 = vadd.f32 %v360, %v785
      %787 = vmatmul.f32.gmra.mxu0 %v388
      %v788 = vpop.f32.mrf.mxu0
      %v789 = vadd.f32 %v360, %v788
      %790 = vmatmul.f32.gmra.mxu0 %v391
      %v791 = vpop.f32.mrf.mxu0
      %v792 = vadd.f32 %v360, %v791
      %793 = vmatmul.f32.gmra.mxu0 %v394
      %v794 = vpop.f32.mrf.mxu0
      %v795 = vadd.f32 %v360, %v794
      %796 = vmatmul.f32.gmra.mxu0 %v397
      %v797 = vpop.f32.mrf.mxu0
      %v798 = vadd.f32 %v360, %v797
      %799 = vmatmul.f32.gmra.mxu0 %v400
      %v800 = vpop.f32.mrf.mxu0
      %v801 = vadd.f32 %v360, %v800
      %802 = vmatmul.f32.gmra.mxu0 %v403
      %v803 = vpop.f32.mrf.mxu0
      %v804 = vadd.f32 %v360, %v803
      %805 = vmatmul.f32.gmra.mxu0 %v406
      %v806 = vpop.f32.mrf.mxu0
      %v807 = vadd.f32 %v360, %v806
      %808 = vmatmul.f32.gmra.mxu0 %v409
      %v809 = vpop.f32.mrf.mxu0
      %v810 = vadd.f32 %v360, %v809
      %811 = vmatmul.f32.gmra.mxu0 %v412
      %v812 = vpop.f32.mrf.mxu0
      %v813 = vadd.f32 %v360, %v812
      %814 = vmatmul.f32.gmra.mxu0 %v415
      %v815 = vpop.f32.mrf.mxu0
      %v816 = vadd.f32 %v360, %v815
      %817 = vmatmul.f32.gmra.mxu0 %v418
      %v818 = vpop.f32.mrf.mxu0
      %v819 = vadd.f32 %v360, %v818
      %820 = vmatmul.f32.gmra.mxu0 %v421
      %v821 = vpop.f32.mrf.mxu0
      %v822 = vadd.f32 %v360, %v821
      %823 = vmatmul.f32.gmra.mxu0 %v424
      %v824 = vpop.f32.mrf.mxu0
      %v825 = vadd.f32 %v360, %v824
      %826 = vmatmul.f32.gmra.mxu0 %v427
      %v827 = vpop.f32.mrf.mxu0
      %v828 = vadd.f32 %v360, %v827
      %829 = vmatmul.f32.gmra.mxu0 %v430
      %v830 = vpop.f32.mrf.mxu0
      %v831 = vadd.f32 %v360, %v830
      %832 = vmatmul.f32.gmra.mxu0 %v433
      %v833 = vpop.f32.mrf.mxu0
      %v834 = vadd.f32 %v360, %v833
      %835 = vmatmul.f32.gmra.mxu0 %v436
      %v836 = vpop.f32.mrf.mxu0
      %v837 = vadd.f32 %v360, %v836
      %838 = vmatmul.f32.gmra.mxu0 %v439
      %v839 = vpop.f32.mrf.mxu0
      %v840 = vadd.f32 %v360, %v839
      %841 = vmatmul.f32.gmra.mxu0 %v442
      %v842 = vpop.f32.mrf.mxu0
      %v843 = vadd.f32 %v360, %v842
      %844 = vmatmul.f32.gmra.mxu0 %v445
      %v845 = vpop.f32.mrf.mxu0
      %v846 = vadd.f32 %v360, %v845
      %847 = vmatmul.f32.gmra.mxu0 %v448
      %v848 = vpop.f32.mrf.mxu0
      %v849 = vadd.f32 %v360, %v848
      %850 = vmatmul.f32.gmra.mxu0 %v451
      %v851 = vpop.f32.mrf.mxu0
      %v852 = vadd.f32 %v360, %v851
      %853 = vmatmul.f32.gmra.mxu0 %v454
      %v854 = vpop.f32.mrf.mxu0
      %v855 = vadd.f32 %v360, %v854
      %856 = vmatmul.f32.gmra.mxu0 %v457
      %v857 = vpop.f32.mrf.mxu0
      %v858 = vadd.f32 %v360, %v857
      %859 = vmatmul.f32.gmra.mxu0 %v460
      %v860 = vpop.f32.mrf.mxu0
      %v861 = vadd.f32 %v360, %v860
      %862 = vmatmul.f32.gmra.mxu0 %v463
      %v863 = vpop.f32.mrf.mxu0
      %v864 = vadd.f32 %v360, %v863
      %865 = vmatmul.f32.gmra.mxu0 %v466
      %v866 = vpop.f32.mrf.mxu0
      %v867 = vadd.f32 %v360, %v866
      %868 = vmatmul.f32.gmra.mxu0 %v469
      %v869 = vpop.f32.mrf.mxu0
      %v870 = vadd.f32 %v360, %v869
      %871 = vmatmul.f32.gmra.mxu0 %v472
      %v872 = vpop.f32.mrf.mxu0
      %v873 = vadd.f32 %v360, %v872
      %874 = vmatmul.f32.gmra.mxu0 %v475
      %v875 = vpop.f32.mrf.mxu0
      %v876 = vadd.f32 %v360, %v875
      %877 = vmatmul.f32.gmra.mxu0 %v478
      %v878 = vpop.f32.mrf.mxu0
      %v879 = vadd.f32 %v360, %v878
      %880 = vmatmul.f32.gmra.mxu0 %v481
      %v881 = vpop.f32.mrf.mxu0
      %v882 = vadd.f32 %v360, %v881
      %883 = vmatmul.f32.gmra.mxu0 %v484
      %v884 = vpop.f32.mrf.mxu0
      %v885 = vadd.f32 %v360, %v884
      %886 = vmatmul.f32.gmra.mxu0 %v487
      %v887 = vpop.f32.mrf.mxu0
      %v888 = vadd.f32 %v360, %v887
      %889 = vmatmul.f32.gmra.mxu0 %v490
      %v890 = vpop.f32.mrf.mxu0
      %v891 = vadd.f32 %v360, %v890
      %892 = vmatmul.f32.gmra.mxu0 %v493
      %v893 = vpop.f32.mrf.mxu0
      %v894 = vadd.f32 %v360, %v893
      %895 = vmatmul.f32.gmra.mxu0 %v496
      %v896 = vpop.f32.mrf.mxu0
      %v897 = vadd.f32 %v360, %v896
      %898 = vmatmul.f32.gmra.mxu0 %v499
      %v899 = vpop.f32.mrf.mxu0
      %v900 = vadd.f32 %v360, %v899
      %901 = vmatmul.f32.gmra.mxu0 %v502
      %v902 = vpop.f32.mrf.mxu0
      %v903 = vadd.f32 %v360, %v902
      %904 = vmatmul.f32.gmra.mxu0 %v505
      %v905 = vpop.f32.mrf.mxu0
      %v906 = vadd.f32 %v360, %v905
      %907 = vmatmul.f32.gmra.mxu0 %v508
      %v908 = vpop.f32.mrf.mxu0
      %v909 = vadd.f32 %v360, %v908
      %910 = vmatmul.f32.gmra.mxu0 %v511
      %v911 = vpop.f32.mrf.mxu0
      %v912 = vadd.f32 %v360, %v911
      %913 = vmatmul.f32.gmra.mxu0 %v514
      %v914 = vpop.f32.mrf.mxu0
      %v915 = vadd.f32 %v360, %v914
      %916 = vmatmul.f32.gmra.mxu0 %v517
      %v917 = vpop.f32.mrf.mxu0
      %v918 = vadd.f32 %v360, %v917
      %919 = vmatmul.f32.gmra.mxu0 %v520
      %v920 = vpop.f32.mrf.mxu0
      %v921 = vadd.f32 %v360, %v920
      %922 = vmatmul.f32.gmra.mxu0 %v523
      %v923 = vpop.f32.mrf.mxu0
      %v924 = vadd.f32 %v360, %v923
      %925 = vmatmul.f32.gmra.mxu0 %v526
      %v926 = vpop.f32.mrf.mxu0
      %v927 = vadd.f32 %v360, %v926
      %928 = vmatmul.f32.gmra.mxu0 %v529
      %v929 = vpop.f32.mrf.mxu0
      %v930 = vadd.f32 %v360, %v929
      %931 = vmatmul.f32.gmra.mxu0 %v532
      %v932 = vpop.f32.mrf.mxu0
      %v933 = vadd.f32 %v360, %v932
      %934 = vmatmul.f32.gmra.mxu0 %v535
      %v935 = vpop.f32.mrf.mxu0
      %v936 = vadd.f32 %v360, %v935
      %937 = vmatmul.f32.gmra.mxu0 %v538
      %v938 = vpop.f32.mrf.mxu0
      %v939 = vadd.f32 %v360, %v938
      %940 = vmatmul.f32.gmra.mxu0 %v541
      %v941 = vpop.f32.mrf.mxu0
      %v942 = vadd.f32 %v360, %v941
      %943 = vmatmul.f32.gmra.mxu0 %v544
      %v944 = vpop.f32.mrf.mxu0
      %v945 = vadd.f32 %v360, %v944
      %946 = vmatmul.f32.gmra.mxu0 %v547
      %v947 = vpop.f32.mrf.mxu0
      %v948 = vadd.f32 %v360, %v947
      %949 = vmatmul.f32.gmra.mxu0 %v550
      %v950 = vpop.f32.mrf.mxu0
      %v951 = vadd.f32 %v360, %v950
      %952 = vmatmul.f32.gmra.mxu0 %v553
      %v953 = vpop.f32.mrf.mxu0
      %v954 = vadd.f32 %v360, %v953
      %955 = vmatmul.f32.gmra.mxu0 %v556
      %v956 = vpop.f32.mrf.mxu0
      %v957 = vadd.f32 %v360, %v956
      %958 = vmatmul.f32.gmra.mxu0 %v559
      %v959 = vpop.f32.mrf.mxu0
      %v960 = vadd.f32 %v360, %v959
      %961 = vmatmul.f32.gmra.mxu0 %v562
      %v962 = vpop.f32.mrf.mxu0
      %v963 = vadd.f32 %v360, %v962
      %964 = vmatmul.f32.gmra.mxu0 %v565
      %v965 = vpop.f32.mrf.mxu0
      %v966 = vadd.f32 %v360, %v965
      %967 = vmatmul.f32.gmra.mxu0 %v568
      %v968 = vpop.f32.mrf.mxu0
      %v969 = vadd.f32 %v360, %v968
      %970 = vmatmul.f32.gmra.mxu0 %v571
      %v971 = vpop.f32.mrf.mxu0
      %v972 = vadd.f32 %v360, %v971
      %973 = vmatmul.f32.gmra.mxu0 %v574
      %v974 = vpop.f32.mrf.mxu0
      %v975 = vadd.f32 %v360, %v974
      %976 = vmatmul.f32.gmra.mxu0 %v577
      %v977 = vpop.f32.mrf.mxu0
      %v978 = vadd.f32 %v360, %v977
      %979 = vmatmul.f32.gmra.mxu0 %v580
      %v980 = vpop.f32.mrf.mxu0
      %v981 = vadd.f32 %v360, %v980
      %982 = vmatmul.f32.gmra.mxu0 %v583
      %v983 = vpop.f32.mrf.mxu0
      %v984 = vadd.f32 %v360, %v983
      %985 = vmatmul.f32.gmra.mxu0 %v586
      %v986 = vpop.f32.mrf.mxu0
      %v987 = vadd.f32 %v360, %v986
      %988 = vmatmul.f32.gmra.mxu0 %v589
      %v989 = vpop.f32.mrf.mxu0
      %v990 = vadd.f32 %v360, %v989
      %991 = vmatmul.f32.gmra.mxu0 %v592
      %v992 = vpop.f32.mrf.mxu0
      %v993 = vadd.f32 %v360, %v992
      %994 = vmatmul.f32.gmra.mxu0 %v595
      %v995 = vpop.f32.mrf.mxu0
      %v996 = vadd.f32 %v360, %v995
      %997 = vmatmul.f32.gmra.mxu0 %v598
      %v998 = vpop.f32.mrf.mxu0
      %v999 = vadd.f32 %v360, %v998
      %1000 = vmatmul.f32.gmra.mxu0 %v601
      %v1001 = vpop.f32.mrf.mxu0
      %v1002 = vadd.f32 %v360, %v1001
      %1003 = vmatmul.f32.gmra.mxu0 %v604
      %v1004 = vpop.f32.mrf.mxu0
      %v1005 = vadd.f32 %v360, %v1004
      %1006 = vmatmul.f32.gmra.mxu0 %v607
      %v1007 = vpop.f32.mrf.mxu0
      %v1008 = vadd.f32 %v360, %v1007
      %1009 = vmatmul.f32.gmra.mxu0 %v610
      %v1010 = vpop.f32.mrf.mxu0
      %v1011 = vadd.f32 %v360, %v1010
      %1012 = vmatmul.f32.gmra.mxu0 %v613
      %v1013 = vpop.f32.mrf.mxu0
      %v1014 = vadd.f32 %v360, %v1013
      %1015 = vmatmul.f32.gmra.mxu0 %v616
      %v1016 = vpop.f32.mrf.mxu0
      %v1017 = vadd.f32 %v360, %v1016
      %1018 = vmatmul.f32.gmra.mxu0 %v619
      %v1019 = vpop.f32.mrf.mxu0
      %v1020 = vadd.f32 %v360, %v1019
      %1021 = vmatmul.f32.gmra.mxu0 %v622
      %v1022 = vpop.f32.mrf.mxu0
      %v1023 = vadd.f32 %v360, %v1022
      %1024 = vmatmul.f32.gmra.mxu0 %v625
      %v1025 = vpop.f32.mrf.mxu0
      %v1026 = vadd.f32 %v360, %v1025
      %1027 = vmatmul.f32.gmra.mxu0 %v628
      %v1028 = vpop.f32.mrf.mxu0
      %v1029 = vadd.f32 %v360, %v1028
      %1030 = vmatmul.f32.gmra.mxu0 %v631
      %v1031 = vpop.f32.mrf.mxu0
      %v1032 = vadd.f32 %v360, %v1031
      %1033 = vmatmul.f32.gmra.mxu0 %v634
      %v1034 = vpop.f32.mrf.mxu0
      %v1035 = vadd.f32 %v360, %v1034
      %1036 = vmatmul.f32.gmra.mxu0 %v637
      %v1037 = vpop.f32.mrf.mxu0
      %v1038 = vadd.f32 %v360, %v1037
      %1039 = vmatmul.f32.gmra.mxu0 %v640
      %v1040 = vpop.f32.mrf.mxu0
      %v1041 = vadd.f32 %v360, %v1040
      %1042 = vmatmul.f32.gmra.mxu0 %v643
      %v1043 = vpop.f32.mrf.mxu0
      %v1044 = vadd.f32 %v360, %v1043
      %1045 = vmatmul.f32.gmra.mxu0 %v646
      %v1046 = vpop.f32.mrf.mxu0
      %v1047 = vadd.f32 %v360, %v1046
      %1048 = vmatmul.f32.gmra.mxu0 %v649
      %v1049 = vpop.f32.mrf.mxu0
      %v1050 = vadd.f32 %v360, %v1049
      %1051 = vmatmul.f32.gmra.mxu0 %v652
      %v1052 = vpop.f32.mrf.mxu0
      %v1053 = vadd.f32 %v360, %v1052
      %1054 = vmatmul.f32.gmra.mxu0 %v655
      %v1055 = vpop.f32.mrf.mxu0
      %v1056 = vadd.f32 %v360, %v1055
      %1057 = vmatmul.f32.gmra.mxu0 %v658
      %v1058 = vpop.f32.mrf.mxu0
      %v1059 = vadd.f32 %v360, %v1058
      %1060 = vmatmul.f32.gmra.mxu0 %v661
      %v1061 = vpop.f32.mrf.mxu0
      %v1062 = vadd.f32 %v360, %v1061
      %1063 = vmatmul.f32.gmra.mxu0 %v664
      %v1064 = vpop.f32.mrf.mxu0
      %v1065 = vadd.f32 %v360, %v1064
      %1066 = vmatmul.f32.gmra.mxu0 %v667
      %v1067 = vpop.f32.mrf.mxu0
      %v1068 = vadd.f32 %v360, %v1067
      %1069 = vmatmul.f32.gmra.mxu0 %v670
      %v1070 = vpop.f32.mrf.mxu0
      %v1071 = vadd.f32 %v360, %v1070
      %1072 = vmatmul.f32.gmra.mxu0 %v673
      %v1073 = vpop.f32.mrf.mxu0
      %v1074 = vadd.f32 %v360, %v1073
      %1075 = vmatmul.f32.gmra.mxu0 %v676
      %v1076 = vpop.f32.mrf.mxu0
      %v1077 = vadd.f32 %v360, %v1076
      %1078 = vmatmul.f32.gmra.mxu0 %v679
      %v1079 = vpop.f32.mrf.mxu0
      %v1080 = vadd.f32 %v360, %v1079
      %1081 = vmatmul.f32.gmra.mxu0 %v682
      %v1082 = vpop.f32.mrf.mxu0
      %v1083 = vadd.f32 %v360, %v1082
      %1084 = vmatmul.f32.gmra.mxu0 %v685
      %v1085 = vpop.f32.mrf.mxu0
      %v1086 = vadd.f32 %v360, %v1085
      %1087 = vmatmul.f32.gmra.mxu0 %v688
      %v1088 = vpop.f32.mrf.mxu0
      %v1089 = vadd.f32 %v360, %v1088
      %1090 = vmatmul.f32.gmra.mxu0 %v691
      %v1091 = vpop.f32.mrf.mxu0
      %v1092 = vadd.f32 %v360, %v1091
      %1093 = vmatmul.f32.gmra.mxu0 %v694
      %v1094 = vpop.f32.mrf.mxu0
      %v1095 = vadd.f32 %v360, %v1094
      %1096 = vmatmul.f32.gmra.mxu0 %v697
      %v1097 = vpop.f32.mrf.mxu0
      %v1098 = vadd.f32 %v360, %v1097
      %1099 = vmatmul.f32.gmra.mxu0 %v700
      %v1100 = vpop.f32.mrf.mxu0
      %v1101 = vadd.f32 %v360, %v1100
      %1102 = vmatmul.f32.gmra.mxu0 %v703
      %v1103 = vpop.f32.mrf.mxu0
      %v1104 = vadd.f32 %v360, %v1103
      %1105 = vmatmul.f32.gmra.mxu0 %v706
      %v1106 = vpop.f32.mrf.mxu0
      %v1107 = vadd.f32 %v360, %v1106
      %1108 = vmatmul.f32.gmra.mxu0 %v709
      %v1109 = vpop.f32.mrf.mxu0
      %v1110 = vadd.f32 %v360, %v1109
      %1111 = vmatmul.f32.gmra.mxu0 %v712
      %v1112 = vpop.f32.mrf.mxu0
      %v1113 = vadd.f32 %v360, %v1112
      %1114 = vmatmul.f32.gmra.mxu0 %v715
      %v1115 = vpop.f32.mrf.mxu0
      %v1116 = vadd.f32 %v360, %v1115
      %1117 = vmatmul.f32.gmra.mxu0 %v718
      %v1118 = vpop.f32.mrf.mxu0
      %v1119 = vadd.f32 %v360, %v1118
      %1120 = vmatmul.f32.gmra.mxu0 %v721
      %v1121 = vpop.f32.mrf.mxu0
      %v1122 = vadd.f32 %v360, %v1121
      %1123 = vmatmul.f32.gmra.mxu0 %v724
      %v1124 = vpop.f32.mrf.mxu0
      %v1125 = vadd.f32 %v360, %v1124
      %1126 = vmatmul.f32.gmra.mxu0 %v727
      %v1127 = vpop.f32.mrf.mxu0
      %v1128 = vadd.f32 %v360, %v1127
      %1129 = vmatmul.f32.gmra.mxu0 %v730
      %v1130 = vpop.f32.mrf.mxu0
      %v1131 = vadd.f32 %v360, %v1130
      %1132 = vmatmul.f32.gmra.mxu0 %v733
      %v1133 = vpop.f32.mrf.mxu0
      %v1134 = vadd.f32 %v360, %v1133
      %1135 = vmatmul.f32.gmra.mxu0 %v736
      %v1136 = vpop.f32.mrf.mxu0
      %v1137 = vadd.f32 %v360, %v1136
      %1138 = vmatmul.f32.gmra.mxu0 %v739
      %v1139 = vpop.f32.mrf.mxu0
      %v1140 = vadd.f32 %v360, %v1139
      %1141 = vmatmul.f32.gmra.mxu0 %v742
      %v1142 = vpop.f32.mrf.mxu0
      %v1143 = vadd.f32 %v360, %v1142
      %1144 = vmatmul.f32.gmra.mxu0 %v745
      %v1145 = vpop.f32.mrf.mxu0
      %v1146 = vadd.f32 %v360, %v1145
      %1147 = vdwg.mxu0
      %vm1148 = vcmp.gt.f32.partialorder %v765, 0.0
      %vm1149 = vcmp.gt.f32.partialorder %v768, 0.0
      %vm1150 = vcmp.gt.f32.partialorder %v771, 0.0
      %vm1151 = vcmp.gt.f32.partialorder %v774, 0.0
      %vm1152 = vcmp.gt.f32.partialorder %v777, 0.0
      %vm1153 = vcmp.gt.f32.partialorder %v780, 0.0
      %vm1154 = vcmp.gt.f32.partialorder %v783, 0.0
      %vm1155 = vcmp.gt.f32.partialorder %v786, 0.0
      %vm1156 = vcmp.gt.f32.partialorder %v789, 0.0
      %vm1157 = vcmp.gt.f32.partialorder %v792, 0.0
      %vm1158 = vcmp.gt.f32.partialorder %v795, 0.0
      %vm1159 = vcmp.gt.f32.partialorder %v798, 0.0
      %vm1160 = vcmp.gt.f32.partialorder %v801, 0.0
      %vm1161 = vcmp.gt.f32.partialorder %v804, 0.0
      %vm1162 = vcmp.gt.f32.partialorder %v807, 0.0
      %vm1163 = vcmp.gt.f32.partialorder %v810, 0.0
      %vm1164 = vcmp.gt.f32.partialorder %v813, 0.0
      %vm1165 = vcmp.gt.f32.partialorder %v816, 0.0
      %vm1166 = vcmp.gt.f32.partialorder %v819, 0.0
      %vm1167 = vcmp.gt.f32.partialorder %v822, 0.0
      %vm1168 = vcmp.gt.f32.partialorder %v825, 0.0
      %vm1169 = vcmp.gt.f32.partialorder %v828, 0.0
      %vm1170 = vcmp.gt.f32.partialorder %v831, 0.0
      %vm1171 = vcmp.gt.f32.partialorder %v834, 0.0
      %vm1172 = vcmp.gt.f32.partialorder %v837, 0.0
      %vm1173 = vcmp.gt.f32.partialorder %v840, 0.0
      %vm1174 = vcmp.gt.f32.partialorder %v843, 0.0
      %vm1175 = vcmp.gt.f32.partialorder %v846, 0.0
      %vm1176 = vcmp.gt.f32.partialorder %v849, 0.0
      %vm1177 = vcmp.gt.f32.partialorder %v852, 0.0
      %vm1178 = vcmp.gt.f32.partialorder %v855, 0.0
      %vm1179 = vcmp.gt.f32.partialorder %v858, 0.0
      %vm1180 = vcmp.gt.f32.partialorder %v861, 0.0
      %vm1181 = vcmp.gt.f32.partialorder %v864, 0.0
      %vm1182 = vcmp.gt.f32.partialorder %v867, 0.0
      %vm1183 = vcmp.gt.f32.partialorder %v870, 0.0
      %vm1184 = vcmp.gt.f32.partialorder %v873, 0.0
      %vm1185 = vcmp.gt.f32.partialorder %v876, 0.0
      %vm1186 = vcmp.gt.f32.partialorder %v879, 0.0
      %vm1187 = vcmp.gt.f32.partialorder %v882, 0.0
      %vm1188 = vcmp.gt.f32.partialorder %v885, 0.0
      %vm1189 = vcmp.gt.f32.partialorder %v888, 0.0
      %vm1190 = vcmp.gt.f32.partialorder %v891, 0.0
      %vm1191 = vcmp.gt.f32.partialorder %v894, 0.0
      %vm1192 = vcmp.gt.f32.partialorder %v897, 0.0
      %vm1193 = vcmp.gt.f32.partialorder %v900, 0.0
      %vm1194 = vcmp.gt.f32.partialorder %v903, 0.0
      %vm1195 = vcmp.gt.f32.partialorder %v906, 0.0
      %vm1196 = vcmp.gt.f32.partialorder %v909, 0.0
      %vm1197 = vcmp.gt.f32.partialorder %v912, 0.0
      %vm1198 = vcmp.gt.f32.partialorder %v915, 0.0
      %vm1199 = vcmp.gt.f32.partialorder %v918, 0.0
      %vm1200 = vcmp.gt.f32.partialorder %v921, 0.0
      %vm1201 = vcmp.gt.f32.partialorder %v924, 0.0
      %vm1202 = vcmp.gt.f32.partialorder %v927, 0.0
      %vm1203 = vcmp.gt.f32.partialorder %v930, 0.0
      %vm1204 = vcmp.gt.f32.partialorder %v933, 0.0
      %vm1205 = vcmp.gt.f32.partialorder %v936, 0.0
      %vm1206 = vcmp.gt.f32.partialorder %v939, 0.0
      %vm1207 = vcmp.gt.f32.partialorder %v942, 0.0
      %vm1208 = vcmp.gt.f32.partialorder %v945, 0.0
      %vm1209 = vcmp.gt.f32.partialorder %v948, 0.0
      %vm1210 = vcmp.gt.f32.partialorder %v951, 0.0
      %vm1211 = vcmp.gt.f32.partialorder %v954, 0.0
      %vm1212 = vcmp.gt.f32.partialorder %v957, 0.0
      %vm1213 = vcmp.gt.f32.partialorder %v960, 0.0
      %vm1214 = vcmp.gt.f32.partialorder %v963, 0.0
      %vm1215 = vcmp.gt.f32.partialorder %v966, 0.0
      %vm1216 = vcmp.gt.f32.partialorder %v969, 0.0
      %vm1217 = vcmp.gt.f32.partialorder %v972, 0.0
      %vm1218 = vcmp.gt.f32.partialorder %v975, 0.0
      %vm1219 = vcmp.gt.f32.partialorder %v978, 0.0
      %vm1220 = vcmp.gt.f32.partialorder %v981, 0.0
      %vm1221 = vcmp.gt.f32.partialorder %v984, 0.0
      %vm1222 = vcmp.gt.f32.partialorder %v987, 0.0
      %vm1223 = vcmp.gt.f32.partialorder %v990, 0.0
      %vm1224 = vcmp.gt.f32.partialorder %v993, 0.0
      %vm1225 = vcmp.gt.f32.partialorder %v996, 0.0
      %vm1226 = vcmp.gt.f32.partialorder %v999, 0.0
      %vm1227 = vcmp.gt.f32.partialorder %v1002, 0.0
      %vm1228 = vcmp.gt.f32.partialorder %v1005, 0.0
      %vm1229 = vcmp.gt.f32.partialorder %v1008, 0.0
      %vm1230 = vcmp.gt.f32.partialorder %v1011, 0.0
      %vm1231 = vcmp.gt.f32.partialorder %v1014, 0.0
      %vm1232 = vcmp.gt.f32.partialorder %v1017, 0.0
      %vm1233 = vcmp.gt.f32.partialorder %v1020, 0.0
      %vm1234 = vcmp.gt.f32.partialorder %v1023, 0.0
      %vm1235 = vcmp.gt.f32.partialorder %v1026, 0.0
      %vm1236 = vcmp.gt.f32.partialorder %v1029, 0.0
      %vm1237 = vcmp.gt.f32.partialorder %v1032, 0.0
      %vm1238 = vcmp.gt.f32.partialorder %v1035, 0.0
      %vm1239 = vcmp.gt.f32.partialorder %v1038, 0.0
      %vm1240 = vcmp.gt.f32.partialorder %v1041, 0.0
      %vm1241 = vcmp.gt.f32.partialorder %v1044, 0.0
      %vm1242 = vcmp.gt.f32.partialorder %v1047, 0.0
      %vm1243 = vcmp.gt.f32.partialorder %v1050, 0.0
      %vm1244 = vcmp.gt.f32.partialorder %v1053, 0.0
      %vm1245 = vcmp.gt.f32.partialorder %v1056, 0.0
      %vm1246 = vcmp.gt.f32.partialorder %v1059, 0.0
      %vm1247 = vcmp.gt.f32.partialorder %v1062, 0.0
      %vm1248 = vcmp.gt.f32.partialorder %v1065, 0.0
      %vm1249 = vcmp.gt.f32.partialorder %v1068, 0.0
      %vm1250 = vcmp.gt.f32.partialorder %v1071, 0.0
      %vm1251 = vcmp.gt.f32.partialorder %v1074, 0.0
      %vm1252 = vcmp.gt.f32.partialorder %v1077, 0.0
      %vm1253 = vcmp.gt.f32.partialorder %v1080, 0.0
      %vm1254 = vcmp.gt.f32.partialorder %v1083, 0.0
      %vm1255 = vcmp.gt.f32.partialorder %v1086, 0.0
      %vm1256 = vcmp.gt.f32.partialorder %v1089, 0.0
      %vm1257 = vcmp.gt.f32.partialorder %v1092, 0.0
      %vm1258 = vcmp.gt.f32.partialorder %v1095, 0.0
      %vm1259 = vcmp.gt.f32.partialorder %v1098, 0.0
      %vm1260 = vcmp.gt.f32.partialorder %v1101, 0.0
      %vm1261 = vcmp.gt.f32.partialorder %v1104, 0.0
      %vm1262 = vcmp.gt.f32.partialorder %v1107, 0.0
      %vm1263 = vcmp.gt.f32.partialorder %v1110, 0.0
      %vm1264 = vcmp.gt.f32.partialorder %v1113, 0.0
      %vm1265 = vcmp.gt.f32.partialorder %v1116, 0.0
      %vm1266 = vcmp.gt.f32.partialorder %v1119, 0.0
      %vm1267 = vcmp.gt.f32.partialorder %v1122, 0.0
      %vm1268 = vcmp.gt.f32.partialorder %v1125, 0.0
      %vm1269 = vcmp.gt.f32.partialorder %v1128, 0.0
      %vm1270 = vcmp.gt.f32.partialorder %v1131, 0.0
      %vm1271 = vcmp.gt.f32.partialorder %v1134, 0.0
      %vm1272 = vcmp.gt.f32.partialorder %v1137, 0.0
      %vm1273 = vcmp.gt.f32.partialorder %v1140, 0.0
      %vm1274 = vcmp.gt.f32.partialorder %v1143, 0.0
      %vm1275 = vcmp.gt.f32.partialorder %v1146, 0.0
      %v1276 = vmul.f32 %v765, 0.01
      %v1277 = vmul.f32 %v768, 0.01
      %v1278 = vmul.f32 %v771, 0.01
      %v1279 = vmul.f32 %v774, 0.01
      %v1280 = vmul.f32 %v777, 0.01
      %v1281 = vmul.f32 %v780, 0.01
      %v1282 = vmul.f32 %v783, 0.01
      %v1283 = vmul.f32 %v786, 0.01
      %v1284 = vmul.f32 %v789, 0.01
      %v1285 = vmul.f32 %v792, 0.01
      %v1286 = vmul.f32 %v795, 0.01
      %v1287 = vmul.f32 %v798, 0.01
      %v1288 = vmul.f32 %v801, 0.01
      %v1289 = vmul.f32 %v804, 0.01
      %v1290 = vmul.f32 %v807, 0.01
      %v1291 = vmul.f32 %v810, 0.01
      %v1292 = vmul.f32 %v813, 0.01
      %v1293 = vmul.f32 %v816, 0.01
      %v1294 = vmul.f32 %v819, 0.01
      %v1295 = vmul.f32 %v822, 0.01
      %v1296 = vmul.f32 %v825, 0.01
      %v1297 = vmul.f32 %v828, 0.01
      %v1298 = vmul.f32 %v831, 0.01
      %v1299 = vmul.f32 %v834, 0.01
      %v1300 = vmul.f32 %v837, 0.01
      %v1301 = vmul.f32 %v840, 0.01
      %v1302 = vmul.f32 %v843, 0.01
      %v1303 = vmul.f32 %v846, 0.01
      %v1304 = vmul.f32 %v849, 0.01
      %v1305 = vmul.f32 %v852, 0.01
      %v1306 = vmul.f32 %v855, 0.01
      %v1307 = vmul.f32 %v858, 0.01
      %v1308 = vmul.f32 %v861, 0.01
      %v1309 = vmul.f32 %v864, 0.01
      %v1310 = vmul.f32 %v867, 0.01
      %v1311 = vmul.f32 %v870, 0.01
      %v1312 = vmul.f32 %v873, 0.01
      %v1313 = vmul.f32 %v876, 0.01
      %v1314 = vmul.f32 %v879, 0.01
      %v1315 = vmul.f32 %v882, 0.01
      %v1316 = vmul.f32 %v885, 0.01
      %v1317 = vmul.f32 %v888, 0.01
      %v1318 = vmul.f32 %v891, 0.01
      %v1319 = vmul.f32 %v894, 0.01
      %v1320 = vmul.f32 %v897, 0.01
      %v1321 = vmul.f32 %v900, 0.01
      %v1322 = vmul.f32 %v903, 0.01
      %v1323 = vmul.f32 %v906, 0.01
      %v1324 = vmul.f32 %v909, 0.01
      %v1325 = vmul.f32 %v912, 0.01
      %v1326 = vmul.f32 %v915, 0.01
      %v1327 = vmul.f32 %v918, 0.01
      %v1328 = vmul.f32 %v921, 0.01
      %v1329 = vmul.f32 %v924, 0.01
      %v1330 = vmul.f32 %v927, 0.01
      %v1331 = vmul.f32 %v930, 0.01
      %v1332 = vmul.f32 %v933, 0.01
      %v1333 = vmul.f32 %v936, 0.01
      %v1334 = vmul.f32 %v939, 0.01
      %v1335 = vmul.f32 %v942, 0.01
      %v1336 = vmul.f32 %v945, 0.01
      %v1337 = vmul.f32 %v948, 0.01
      %v1338 = vmul.f32 %v951, 0.01
      %v1339 = vmul.f32 %v954, 0.01
      %v1340 = vmul.f32 %v957, 0.01
      %v1341 = vmul.f32 %v960, 0.01
      %v1342 = vmul.f32 %v963, 0.01
      %v1343 = vmul.f32 %v966, 0.01
      %v1344 = vmul.f32 %v969, 0.01
      %v1345 = vmul.f32 %v972, 0.01
      %v1346 = vmul.f32 %v975, 0.01
      %v1347 = vmul.f32 %v978, 0.01
      %v1348 = vmul.f32 %v981, 0.01
      %v1349 = vmul.f32 %v984, 0.01
      %v1350 = vmul.f32 %v987, 0.01
      %v1351 = vmul.f32 %v990, 0.01
      %v1352 = vmul.f32 %v993, 0.01
      %v1353 = vmul.f32 %v996, 0.01
      %v1354 = vmul.f32 %v999, 0.01
      %v1355 = vmul.f32 %v1002, 0.01
      %v1356 = vmul.f32 %v1005, 0.01
      %v1357 = vmul.f32 %v1008, 0.01
      %v1358 = vmul.f32 %v1011, 0.01
      %v1359 = vmul.f32 %v1014, 0.01
      %v1360 = vmul.f32 %v1017, 0.01
      %v1361 = vmul.f32 %v1020, 0.01
      %v1362 = vmul.f32 %v1023, 0.01
      %v1363 = vmul.f32 %v1026, 0.01
      %v1364 = vmul.f32 %v1029, 0.01
      %v1365 = vmul.f32 %v1032, 0.01
      %v1366 = vmul.f32 %v1035, 0.01
      %v1367 = vmul.f32 %v1038, 0.01
      %v1368 = vmul.f32 %v1041, 0.01
      %v1369 = vmul.f32 %v1044, 0.01
      %v1370 = vmul.f32 %v1047, 0.01
      %v1371 = vmul.f32 %v1050, 0.01
      %v1372 = vmul.f32 %v1053, 0.01
      %v1373 = vmul.f32 %v1056, 0.01
      %v1374 = vmul.f32 %v1059, 0.01
      %v1375 = vmul.f32 %v1062, 0.01
      %v1376 = vmul.f32 %v1065, 0.01
      %v1377 = vmul.f32 %v1068, 0.01
      %v1378 = vmul.f32 %v1071, 0.01
      %v1379 = vmul.f32 %v1074, 0.01
      %v1380 = vmul.f32 %v1077, 0.01
      %v1381 = vmul.f32 %v1080, 0.01
      %v1382 = vmul.f32 %v1083, 0.01
      %v1383 = vmul.f32 %v1086, 0.01
      %v1384 = vmul.f32 %v1089, 0.01
      %v1385 = vmul.f32 %v1092, 0.01
      %v1386 = vmul.f32 %v1095, 0.01
      %v1387 = vmul.f32 %v1098, 0.01
      %v1388 = vmul.f32 %v1101, 0.01
      %v1389 = vmul.f32 %v1104, 0.01
      %v1390 = vmul.f32 %v1107, 0.01
      %v1391 = vmul.f32 %v1110, 0.01
      %v1392 = vmul.f32 %v1113, 0.01
      %v1393 = vmul.f32 %v1116, 0.01
      %v1394 = vmul.f32 %v1119, 0.01
      %v1395 = vmul.f32 %v1122, 0.01
      %v1396 = vmul.f32 %v1125, 0.01
      %v1397 = vmul.f32 %v1128, 0.01
      %v1398 = vmul.f32 %v1131, 0.01
      %v1399 = vmul.f32 %v1134, 0.01
      %v1400 = vmul.f32 %v1137, 0.01
      %v1401 = vmul.f32 %v1140, 0.01
      %v1402 = vmul.f32 %v1143, 0.01
      %v1403 = vmul.f32 %v1146, 0.01
      %v1404 = vsel %vm1148, %v765, %v1276
      %v1405 = vsel %vm1149, %v768, %v1277
      %v1406 = vsel %vm1150, %v771, %v1278
      %v1407 = vsel %vm1151, %v774, %v1279
      %v1408 = vsel %vm1152, %v777, %v1280
      %v1409 = vsel %vm1153, %v780, %v1281
      %v1410 = vsel %vm1154, %v783, %v1282
      %v1411 = vsel %vm1155, %v786, %v1283
      %v1412 = vsel %vm1156, %v789, %v1284
      %v1413 = vsel %vm1157, %v792, %v1285
      %v1414 = vsel %vm1158, %v795, %v1286
      %v1415 = vsel %vm1159, %v798, %v1287
      %v1416 = vsel %vm1160, %v801, %v1288
      %v1417 = vsel %vm1161, %v804, %v1289
      %v1418 = vsel %vm1162, %v807, %v1290
      %v1419 = vsel %vm1163, %v810, %v1291
      %v1420 = vsel %vm1164, %v813, %v1292
      %v1421 = vsel %vm1165, %v816, %v1293
      %v1422 = vsel %vm1166, %v819, %v1294
      %v1423 = vsel %vm1167, %v822, %v1295
      %v1424 = vsel %vm1168, %v825, %v1296
      %v1425 = vsel %vm1169, %v828, %v1297
      %v1426 = vsel %vm1170, %v831, %v1298
      %v1427 = vsel %vm1171, %v834, %v1299
      %v1428 = vsel %vm1172, %v837, %v1300
      %v1429 = vsel %vm1173, %v840, %v1301
      %v1430 = vsel %vm1174, %v843, %v1302
      %v1431 = vsel %vm1175, %v846, %v1303
      %v1432 = vsel %vm1176, %v849, %v1304
      %v1433 = vsel %vm1177, %v852, %v1305
      %v1434 = vsel %vm1178, %v855, %v1306
      %v1435 = vsel %vm1179, %v858, %v1307
      %v1436 = vsel %vm1180, %v861, %v1308
      %v1437 = vsel %vm1181, %v864, %v1309
      %v1438 = vsel %vm1182, %v867, %v1310
      %v1439 = vsel %vm1183, %v870, %v1311
      %v1440 = vsel %vm1184, %v873, %v1312
      %v1441 = vsel %vm1185, %v876, %v1313
      %v1442 = vsel %vm1186, %v879, %v1314
      %v1443 = vsel %vm1187, %v882, %v1315
      %v1444 = vsel %vm1188, %v885, %v1316
      %v1445 = vsel %vm1189, %v888, %v1317
      %v1446 = vsel %vm1190, %v891, %v1318
      %v1447 = vsel %vm1191, %v894, %v1319
      %v1448 = vsel %vm1192, %v897, %v1320
      %v1449 = vsel %vm1193, %v900, %v1321
      %v1450 = vsel %vm1194, %v903, %v1322
      %v1451 = vsel %vm1195, %v906, %v1323
      %v1452 = vsel %vm1196, %v909, %v1324
      %v1453 = vsel %vm1197, %v912, %v1325
      %v1454 = vsel %vm1198, %v915, %v1326
      %v1455 = vsel %vm1199, %v918, %v1327
      %v1456 = vsel %vm1200, %v921, %v1328
      %v1457 = vsel %vm1201, %v924, %v1329
      %v1458 = vsel %vm1202, %v927, %v1330
      %v1459 = vsel %vm1203, %v930, %v1331
      %v1460 = vsel %vm1204, %v933, %v1332
      %v1461 = vsel %vm1205, %v936, %v1333
      %v1462 = vsel %vm1206, %v939, %v1334
      %v1463 = vsel %vm1207, %v942, %v1335
      %v1464 = vsel %vm1208, %v945, %v1336
      %v1465 = vsel %vm1209, %v948, %v1337
      %v1466 = vsel %vm1210, %v951, %v1338
      %v1467 = vsel %vm1211, %v954, %v1339
      %v1468 = vsel %vm1212, %v957, %v1340
      %v1469 = vsel %vm1213, %v960, %v1341
      %v1470 = vsel %vm1214, %v963, %v1342
      %v1471 = vsel %vm1215, %v966, %v1343
      %v1472 = vsel %vm1216, %v969, %v1344
      %v1473 = vsel %vm1217, %v972, %v1345
      %v1474 = vsel %vm1218, %v975, %v1346
      %v1475 = vsel %vm1219, %v978, %v1347
      %v1476 = vsel %vm1220, %v981, %v1348
      %v1477 = vsel %vm1221, %v984, %v1349
      %v1478 = vsel %vm1222, %v987, %v1350
      %v1479 = vsel %vm1223, %v990, %v1351
      %v1480 = vsel %vm1224, %v993, %v1352
      %v1481 = vsel %vm1225, %v996, %v1353
      %v1482 = vsel %vm1226, %v999, %v1354
      %v1483 = vsel %vm1227, %v1002, %v1355
      %v1484 = vsel %vm1228, %v1005, %v1356
      %v1485 = vsel %vm1229, %v1008, %v1357
      %v1486 = vsel %vm1230, %v1011, %v1358
      %v1487 = vsel %vm1231, %v1014, %v1359
      %v1488 = vsel %vm1232, %v1017, %v1360
      %v1489 = vsel %vm1233, %v1020, %v1361
      %v1490 = vsel %vm1234, %v1023, %v1362
      %v1491 = vsel %vm1235, %v1026, %v1363
      %v1492 = vsel %vm1236, %v1029, %v1364
      %v1493 = vsel %vm1237, %v1032, %v1365
      %v1494 = vsel %vm1238, %v1035, %v1366
      %v1495 = vsel %vm1239, %v1038, %v1367
      %v1496 = vsel %vm1240, %v1041, %v1368
      %v1497 = vsel %vm1241, %v1044, %v1369
      %v1498 = vsel %vm1242, %v1047, %v1370
      %v1499 = vsel %vm1243, %v1050, %v1371
      %v1500 = vsel %vm1244, %v1053, %v1372
      %v1501 = vsel %vm1245, %v1056, %v1373
      %v1502 = vsel %vm1246, %v1059, %v1374
      %v1503 = vsel %vm1247, %v1062, %v1375
      %v1504 = vsel %vm1248, %v1065, %v1376
      %v1505 = vsel %vm1249, %v1068, %v1377
      %v1506 = vsel %vm1250, %v1071, %v1378
      %v1507 = vsel %vm1251, %v1074, %v1379
      %v1508 = vsel %vm1252, %v1077, %v1380
      %v1509 = vsel %vm1253, %v1080, %v1381
      %v1510 = vsel %vm1254, %v1083, %v1382
      %v1511 = vsel %vm1255, %v1086, %v1383
      %v1512 = vsel %vm1256, %v1089, %v1384
      %v1513 = vsel %vm1257, %v1092, %v1385
      %v1514 = vsel %vm1258, %v1095, %v1386
      %v1515 = vsel %vm1259, %v1098, %v1387
      %v1516 = vsel %vm1260, %v1101, %v1388
      %v1517 = vsel %vm1261, %v1104, %v1389
      %v1518 = vsel %vm1262, %v1107, %v1390
      %v1519 = vsel %vm1263, %v1110, %v1391
      %v1520 = vsel %vm1264, %v1113, %v1392
      %v1521 = vsel %vm1265, %v1116, %v1393
      %v1522 = vsel %vm1266, %v1119, %v1394
      %v1523 = vsel %vm1267, %v1122, %v1395
      %v1524 = vsel %vm1268, %v1125, %v1396
      %v1525 = vsel %vm1269, %v1128, %v1397
      %v1526 = vsel %vm1270, %v1131, %v1398
      %v1527 = vsel %vm1271, %v1134, %v1399
      %v1528 = vsel %vm1272, %v1137, %v1400
      %v1529 = vsel %vm1273, %v1140, %v1401
      %v1530 = vsel %vm1274, %v1143, %v1402
      %v1531 = vsel %vm1275, %v1146, %v1403
      %v1532 = vld [vmem:[%s3] sm:$0xff]
      %v1533 = vld [vmem:[%s3 + $0x8] sm:$0xff]
      %v1534 = vld [vmem:[%s3 + $0x10] sm:$0xff]
      %v1535 = vld [vmem:[%s3 + $0x18] sm:$0xff]
      %v1536 = vld [vmem:[%s4] sm:$0x1]
      %v1538 = vperm.slane %v1536, 0
      %vm1540 = vcmask 261120
      %v1542 = vsel %vm1540, %v1404, 0
      %v1545 = vsel %vm1540, %v1405, 0
      %v1548 = vsel %vm1540, %v1406, 0
      %v1551 = vsel %vm1540, %v1407, 0
      %v1554 = vsel %vm1540, %v1408, 0
      %v1557 = vsel %vm1540, %v1409, 0
      %v1560 = vsel %vm1540, %v1410, 0
      %v1563 = vsel %vm1540, %v1411, 0
      %v1566 = vsel %vm1540, %v1412, 0
      %v1569 = vsel %vm1540, %v1413, 0
      %v1572 = vsel %vm1540, %v1414, 0
      %v1575 = vsel %vm1540, %v1415, 0
      %v1578 = vsel %vm1540, %v1416, 0
      %v1581 = vsel %vm1540, %v1417, 0
      %v1584 = vsel %vm1540, %v1418, 0
      %v1587 = vsel %vm1540, %v1419, 0
      %v1590 = vsel %vm1540, %v1420, 0
      %v1593 = vsel %vm1540, %v1421, 0
      %v1596 = vsel %vm1540, %v1422, 0
      %v1599 = vsel %vm1540, %v1423, 0
      %v1602 = vsel %vm1540, %v1424, 0
      %v1605 = vsel %vm1540, %v1425, 0
      %v1608 = vsel %vm1540, %v1426, 0
      %v1611 = vsel %vm1540, %v1427, 0
      %v1614 = vsel %vm1540, %v1428, 0
      %v1617 = vsel %vm1540, %v1429, 0
      %v1620 = vsel %vm1540, %v1430, 0
      %v1623 = vsel %vm1540, %v1431, 0
      %v1626 = vsel %vm1540, %v1432, 0
      %v1629 = vsel %vm1540, %v1433, 0
      %v1632 = vsel %vm1540, %v1434, 0
      %v1635 = vsel %vm1540, %v1435, 0
      %v1638 = vsel %vm1540, %v1436, 0
      %v1641 = vsel %vm1540, %v1437, 0
      %v1644 = vsel %vm1540, %v1438, 0
      %v1647 = vsel %vm1540, %v1439, 0
      %v1650 = vsel %vm1540, %v1440, 0
      %v1653 = vsel %vm1540, %v1441, 0
      %v1656 = vsel %vm1540, %v1442, 0
      %v1659 = vsel %vm1540, %v1443, 0
      %v1662 = vsel %vm1540, %v1444, 0
      %v1665 = vsel %vm1540, %v1445, 0
      %v1668 = vsel %vm1540, %v1446, 0
      %v1671 = vsel %vm1540, %v1447, 0
      %v1674 = vsel %vm1540, %v1448, 0
      %v1677 = vsel %vm1540, %v1449, 0
      %v1680 = vsel %vm1540, %v1450, 0
      %v1683 = vsel %vm1540, %v1451, 0
      %v1686 = vsel %vm1540, %v1452, 0
      %v1689 = vsel %vm1540, %v1453, 0
      %v1692 = vsel %vm1540, %v1454, 0
      %v1695 = vsel %vm1540, %v1455, 0
      %v1698 = vsel %vm1540, %v1456, 0
      %v1701 = vsel %vm1540, %v1457, 0
      %v1704 = vsel %vm1540, %v1458, 0
      %v1707 = vsel %vm1540, %v1459, 0
      %v1710 = vsel %vm1540, %v1460, 0
      %v1713 = vsel %vm1540, %v1461, 0
      %v1716 = vsel %vm1540, %v1462, 0
      %v1719 = vsel %vm1540, %v1463, 0
      %v1722 = vsel %vm1540, %v1464, 0
      %v1725 = vsel %vm1540, %v1465, 0
      %v1728 = vsel %vm1540, %v1466, 0
      %v1731 = vsel %vm1540, %v1467, 0
      %v1734 = vsel %vm1540, %v1468, 0
      %v1737 = vsel %vm1540, %v1469, 0
      %v1740 = vsel %vm1540, %v1470, 0
      %v1743 = vsel %vm1540, %v1471, 0
      %v1746 = vsel %vm1540, %v1472, 0
      %v1749 = vsel %vm1540, %v1473, 0
      %v1752 = vsel %vm1540, %v1474, 0
      %v1755 = vsel %vm1540, %v1475, 0
      %v1758 = vsel %vm1540, %v1476, 0
      %v1761 = vsel %vm1540, %v1477, 0
      %v1764 = vsel %vm1540, %v1478, 0
      %v1767 = vsel %vm1540, %v1479, 0
      %v1770 = vsel %vm1540, %v1480, 0
      %v1773 = vsel %vm1540, %v1481, 0
      %v1776 = vsel %vm1540, %v1482, 0
      %v1779 = vsel %vm1540, %v1483, 0
      %v1782 = vsel %vm1540, %v1484, 0
      %v1785 = vsel %vm1540, %v1485, 0
      %v1788 = vsel %vm1540, %v1486, 0
      %v1791 = vsel %vm1540, %v1487, 0
      %v1794 = vsel %vm1540, %v1488, 0
      %v1797 = vsel %vm1540, %v1489, 0
      %v1800 = vsel %vm1540, %v1490, 0
      %v1803 = vsel %vm1540, %v1491, 0
      %v1806 = vsel %vm1540, %v1492, 0
      %v1809 = vsel %vm1540, %v1493, 0
      %v1812 = vsel %vm1540, %v1494, 0
      %v1815 = vsel %vm1540, %v1495, 0
      %v1818 = vsel %vm1540, %v1496, 0
      %v1821 = vsel %vm1540, %v1497, 0
      %v1824 = vsel %vm1540, %v1498, 0
      %v1827 = vsel %vm1540, %v1499, 0
      %v1830 = vsel %vm1540, %v1500, 0
      %v1833 = vsel %vm1540, %v1501, 0
      %v1836 = vsel %vm1540, %v1502, 0
      %v1839 = vsel %vm1540, %v1503, 0
      %v1842 = vsel %vm1540, %v1504, 0
      %v1845 = vsel %vm1540, %v1505, 0
      %v1848 = vsel %vm1540, %v1506, 0
      %v1851 = vsel %vm1540, %v1507, 0
      %v1854 = vsel %vm1540, %v1508, 0
      %v1857 = vsel %vm1540, %v1509, 0
      %v1860 = vsel %vm1540, %v1510, 0
      %v1863 = vsel %vm1540, %v1511, 0
      %v1866 = vsel %vm1540, %v1512, 0
      %v1869 = vsel %vm1540, %v1513, 0
      %v1872 = vsel %vm1540, %v1514, 0
      %v1875 = vsel %vm1540, %v1515, 0
      %v1878 = vsel %vm1540, %v1516, 0
      %v1881 = vsel %vm1540, %v1517, 0
      %v1884 = vsel %vm1540, %v1518, 0
      %v1887 = vsel %vm1540, %v1519, 0
      %v1890 = vsel %vm1540, %v1520, 0
      %v1893 = vsel %vm1540, %v1521, 0
      %v1896 = vsel %vm1540, %v1522, 0
      %v1899 = vsel %vm1540, %v1523, 0
      %v1902 = vsel %vm1540, %v1524, 0
      %v1905 = vsel %vm1540, %v1525, 0
      %v1908 = vsel %vm1540, %v1526, 0
      %v1911 = vsel %vm1540, %v1527, 0
      %v1914 = vsel %vm1540, %v1528, 0
      %v1917 = vsel %vm1540, %v1529, 0
      %v1920 = vsel %vm1540, %v1530, 0
      %v1923 = vsel %vm1540, %v1531, 0
      %1925 = vmatpush.msra.mxu0 0.0
      %1926 = vmatpush.msra.mxu0 0.0
      %1927 = vmatpush.msra.mxu0 0.0
      %1928 = vmatpush.msra.mxu0 0.0
      %1929 = vmatpush.msra.mxu0 0.0
      %1930 = vmatpush.msra.mxu0 0.0
      %1931 = vmatpush.msra.mxu0 0.0
      %1932 = vmatpush.msra.mxu0 0.0
      %1933 = vmatpush.msra.mxu0 0.0
      %1934 = vmatpush.msra.mxu0 0.0
      %1935 = vmatpush.msra.mxu0 0.0
      %1936 = vmatpush.msra.mxu0 0.0
      %1937 = vmatpush.msra.mxu0 %v1535
      %1938 = vmatpush.msra.mxu0 %v1534
      %1939 = vmatpush.msra.mxu0 %v1533
      %1940 = vmatpush.msra.mxu0 %v1532
      %1941 = vmatmul.f32.gmra.mxu0 %v1542
      %v1942 = vpop.f32.mrf.mxu0
      %v1943 = vadd.f32 %v1538, %v1942
      %1944 = vmatmul.f32.gmra.mxu0 %v1545
      %v1945 = vpop.f32.mrf.mxu0
      %v1946 = vadd.f32 %v1538, %v1945
      %1947 = vmatmul.f32.gmra.mxu0 %v1548
      %v1948 = vpop.f32.mrf.mxu0
      %v1949 = vadd.f32 %v1538, %v1948
      %1950 = vmatmul.f32.gmra.mxu0 %v1551
      %v1951 = vpop.f32.mrf.mxu0
      %v1952 = vadd.f32 %v1538, %v1951
      %1953 = vmatmul.f32.gmra.mxu0 %v1554
      %v1954 = vpop.f32.mrf.mxu0
      %v1955 = vadd.f32 %v1538, %v1954
      %1956 = vmatmul.f32.gmra.mxu0 %v1557
      %v1957 = vpop.f32.mrf.mxu0
      %v1958 = vadd.f32 %v1538, %v1957
      %1959 = vmatmul.f32.gmra.mxu0 %v1560
      %v1960 = vpop.f32.mrf.mxu0
      %v1961 = vadd.f32 %v1538, %v1960
      %1962 = vmatmul.f32.gmra.mxu0 %v1563
      %v1963 = vpop.f32.mrf.mxu0
      %v1964 = vadd.f32 %v1538, %v1963
      %1965 = vmatmul.f32.gmra.mxu0 %v1566
      %v1966 = vpop.f32.mrf.mxu0
      %v1967 = vadd.f32 %v1538, %v1966
      %1968 = vmatmul.f32.gmra.mxu0 %v1569
      %v1969 = vpop.f32.mrf.mxu0
      %v1970 = vadd.f32 %v1538, %v1969
      %1971 = vmatmul.f32.gmra.mxu0 %v1572
      %v1972 = vpop.f32.mrf.mxu0
      %v1973 = vadd.f32 %v1538, %v1972
      %1974 = vmatmul.f32.gmra.mxu0 %v1575
      %v1975 = vpop.f32.mrf.mxu0
      %v1976 = vadd.f32 %v1538, %v1975
      %1977 = vmatmul.f32.gmra.mxu0 %v1578
      %v1978 = vpop.f32.mrf.mxu0
      %v1979 = vadd.f32 %v1538, %v1978
      %1980 = vmatmul.f32.gmra.mxu0 %v1581
      %v1981 = vpop.f32.mrf.mxu0
      %v1982 = vadd.f32 %v1538, %v1981
      %1983 = vmatmul.f32.gmra.mxu0 %v1584
      %v1984 = vpop.f32.mrf.mxu0
      %v1985 = vadd.f32 %v1538, %v1984
      %1986 = vmatmul.f32.gmra.mxu0 %v1587
      %v1987 = vpop.f32.mrf.mxu0
      %v1988 = vadd.f32 %v1538, %v1987
      %1989 = vmatmul.f32.gmra.mxu0 %v1590
      %v1990 = vpop.f32.mrf.mxu0
      %v1991 = vadd.f32 %v1538, %v1990
      %1992 = vmatmul.f32.gmra.mxu0 %v1593
      %v1993 = vpop.f32.mrf.mxu0
      %v1994 = vadd.f32 %v1538, %v1993
      %1995 = vmatmul.f32.gmra.mxu0 %v1596
      %v1996 = vpop.f32.mrf.mxu0
      %v1997 = vadd.f32 %v1538, %v1996
      %1998 = vmatmul.f32.gmra.mxu0 %v1599
      %v1999 = vpop.f32.mrf.mxu0
      %v2000 = vadd.f32 %v1538, %v1999
      %2001 = vmatmul.f32.gmra.mxu0 %v1602
      %v2002 = vpop.f32.mrf.mxu0
      %v2003 = vadd.f32 %v1538, %v2002
      %2004 = vmatmul.f32.gmra.mxu0 %v1605
      %v2005 = vpop.f32.mrf.mxu0
      %v2006 = vadd.f32 %v1538, %v2005
      %2007 = vmatmul.f32.gmra.mxu0 %v1608
      %v2008 = vpop.f32.mrf.mxu0
      %v2009 = vadd.f32 %v1538, %v2008
      %2010 = vmatmul.f32.gmra.mxu0 %v1611
      %v2011 = vpop.f32.mrf.mxu0
      %v2012 = vadd.f32 %v1538, %v2011
      %2013 = vmatmul.f32.gmra.mxu0 %v1614
      %v2014 = vpop.f32.mrf.mxu0
      %v2015 = vadd.f32 %v1538, %v2014
      %2016 = vmatmul.f32.gmra.mxu0 %v1617
      %v2017 = vpop.f32.mrf.mxu0
      %v2018 = vadd.f32 %v1538, %v2017
      %2019 = vmatmul.f32.gmra.mxu0 %v1620
      %v2020 = vpop.f32.mrf.mxu0
      %v2021 = vadd.f32 %v1538, %v2020
      %2022 = vmatmul.f32.gmra.mxu0 %v1623
      %v2023 = vpop.f32.mrf.mxu0
      %v2024 = vadd.f32 %v1538, %v2023
      %2025 = vmatmul.f32.gmra.mxu0 %v1626
      %v2026 = vpop.f32.mrf.mxu0
      %v2027 = vadd.f32 %v1538, %v2026
      %2028 = vmatmul.f32.gmra.mxu0 %v1629
      %v2029 = vpop.f32.mrf.mxu0
      %v2030 = vadd.f32 %v1538, %v2029
      %2031 = vmatmul.f32.gmra.mxu0 %v1632
      %v2032 = vpop.f32.mrf.mxu0
      %v2033 = vadd.f32 %v1538, %v2032
      %2034 = vmatmul.f32.gmra.mxu0 %v1635
      %v2035 = vpop.f32.mrf.mxu0
      %v2036 = vadd.f32 %v1538, %v2035
      %2037 = vmatmul.f32.gmra.mxu0 %v1638
      %v2038 = vpop.f32.mrf.mxu0
      %v2039 = vadd.f32 %v1538, %v2038
      %2040 = vmatmul.f32.gmra.mxu0 %v1641
      %v2041 = vpop.f32.mrf.mxu0
      %v2042 = vadd.f32 %v1538, %v2041
      %2043 = vmatmul.f32.gmra.mxu0 %v1644
      %v2044 = vpop.f32.mrf.mxu0
      %v2045 = vadd.f32 %v1538, %v2044
      %2046 = vmatmul.f32.gmra.mxu0 %v1647
      %v2047 = vpop.f32.mrf.mxu0
      %v2048 = vadd.f32 %v1538, %v2047
      %2049 = vmatmul.f32.gmra.mxu0 %v1650
      %v2050 = vpop.f32.mrf.mxu0
      %v2051 = vadd.f32 %v1538, %v2050
      %2052 = vmatmul.f32.gmra.mxu0 %v1653
      %v2053 = vpop.f32.mrf.mxu0
      %v2054 = vadd.f32 %v1538, %v2053
      %2055 = vmatmul.f32.gmra.mxu0 %v1656
      %v2056 = vpop.f32.mrf.mxu0
      %v2057 = vadd.f32 %v1538, %v2056
      %2058 = vmatmul.f32.gmra.mxu0 %v1659
      %v2059 = vpop.f32.mrf.mxu0
      %v2060 = vadd.f32 %v1538, %v2059
      %2061 = vmatmul.f32.gmra.mxu0 %v1662
      %v2062 = vpop.f32.mrf.mxu0
      %v2063 = vadd.f32 %v1538, %v2062
      %2064 = vmatmul.f32.gmra.mxu0 %v1665
      %v2065 = vpop.f32.mrf.mxu0
      %v2066 = vadd.f32 %v1538, %v2065
      %2067 = vmatmul.f32.gmra.mxu0 %v1668
      %v2068 = vpop.f32.mrf.mxu0
      %v2069 = vadd.f32 %v1538, %v2068
      %2070 = vmatmul.f32.gmra.mxu0 %v1671
      %v2071 = vpop.f32.mrf.mxu0
      %v2072 = vadd.f32 %v1538, %v2071
      %2073 = vmatmul.f32.gmra.mxu0 %v1674
      %v2074 = vpop.f32.mrf.mxu0
      %v2075 = vadd.f32 %v1538, %v2074
      %2076 = vmatmul.f32.gmra.mxu0 %v1677
      %v2077 = vpop.f32.mrf.mxu0
      %v2078 = vadd.f32 %v1538, %v2077
      %2079 = vmatmul.f32.gmra.mxu0 %v1680
      %v2080 = vpop.f32.mrf.mxu0
      %v2081 = vadd.f32 %v1538, %v2080
      %2082 = vmatmul.f32.gmra.mxu0 %v1683
      %v2083 = vpop.f32.mrf.mxu0
      %v2084 = vadd.f32 %v1538, %v2083
      %2085 = vmatmul.f32.gmra.mxu0 %v1686
      %v2086 = vpop.f32.mrf.mxu0
      %v2087 = vadd.f32 %v1538, %v2086
      %2088 = vmatmul.f32.gmra.mxu0 %v1689
      %v2089 = vpop.f32.mrf.mxu0
      %v2090 = vadd.f32 %v1538, %v2089
      %2091 = vmatmul.f32.gmra.mxu0 %v1692
      %v2092 = vpop.f32.mrf.mxu0
      %v2093 = vadd.f32 %v1538, %v2092
      %2094 = vmatmul.f32.gmra.mxu0 %v1695
      %v2095 = vpop.f32.mrf.mxu0
      %v2096 = vadd.f32 %v1538, %v2095
      %2097 = vmatmul.f32.gmra.mxu0 %v1698
      %v2098 = vpop.f32.mrf.mxu0
      %v2099 = vadd.f32 %v1538, %v2098
      %2100 = vmatmul.f32.gmra.mxu0 %v1701
      %v2101 = vpop.f32.mrf.mxu0
      %v2102 = vadd.f32 %v1538, %v2101
      %2103 = vmatmul.f32.gmra.mxu0 %v1704
      %v2104 = vpop.f32.mrf.mxu0
      %v2105 = vadd.f32 %v1538, %v2104
      %2106 = vmatmul.f32.gmra.mxu0 %v1707
      %v2107 = vpop.f32.mrf.mxu0
      %v2108 = vadd.f32 %v1538, %v2107
      %2109 = vmatmul.f32.gmra.mxu0 %v1710
      %v2110 = vpop.f32.mrf.mxu0
      %v2111 = vadd.f32 %v1538, %v2110
      %2112 = vmatmul.f32.gmra.mxu0 %v1713
      %v2113 = vpop.f32.mrf.mxu0
      %v2114 = vadd.f32 %v1538, %v2113
      %2115 = vmatmul.f32.gmra.mxu0 %v1716
      %v2116 = vpop.f32.mrf.mxu0
      %v2117 = vadd.f32 %v1538, %v2116
      %2118 = vmatmul.f32.gmra.mxu0 %v1719
      %v2119 = vpop.f32.mrf.mxu0
      %v2120 = vadd.f32 %v1538, %v2119
      %2121 = vmatmul.f32.gmra.mxu0 %v1722
      %v2122 = vpop.f32.mrf.mxu0
      %v2123 = vadd.f32 %v1538, %v2122
      %2124 = vmatmul.f32.gmra.mxu0 %v1725
      %v2125 = vpop.f32.mrf.mxu0
      %v2126 = vadd.f32 %v1538, %v2125
      %2127 = vmatmul.f32.gmra.mxu0 %v1728
      %v2128 = vpop.f32.mrf.mxu0
      %v2129 = vadd.f32 %v1538, %v2128
      %2130 = vmatmul.f32.gmra.mxu0 %v1731
      %v2131 = vpop.f32.mrf.mxu0
      %v2132 = vadd.f32 %v1538, %v2131
      %2133 = vmatmul.f32.gmra.mxu0 %v1734
      %v2134 = vpop.f32.mrf.mxu0
      %v2135 = vadd.f32 %v1538, %v2134
      %2136 = vmatmul.f32.gmra.mxu0 %v1737
      %v2137 = vpop.f32.mrf.mxu0
      %v2138 = vadd.f32 %v1538, %v2137
      %2139 = vmatmul.f32.gmra.mxu0 %v1740
      %v2140 = vpop.f32.mrf.mxu0
      %v2141 = vadd.f32 %v1538, %v2140
      %2142 = vmatmul.f32.gmra.mxu0 %v1743
      %v2143 = vpop.f32.mrf.mxu0
      %v2144 = vadd.f32 %v1538, %v2143
      %2145 = vmatmul.f32.gmra.mxu0 %v1746
      %v2146 = vpop.f32.mrf.mxu0
      %v2147 = vadd.f32 %v1538, %v2146
      %2148 = vmatmul.f32.gmra.mxu0 %v1749
      %v2149 = vpop.f32.mrf.mxu0
      %v2150 = vadd.f32 %v1538, %v2149
      %2151 = vmatmul.f32.gmra.mxu0 %v1752
      %v2152 = vpop.f32.mrf.mxu0
      %v2153 = vadd.f32 %v1538, %v2152
      %2154 = vmatmul.f32.gmra.mxu0 %v1755
      %v2155 = vpop.f32.mrf.mxu0
      %v2156 = vadd.f32 %v1538, %v2155
      %2157 = vmatmul.f32.gmra.mxu0 %v1758
      %v2158 = vpop.f32.mrf.mxu0
      %v2159 = vadd.f32 %v1538, %v2158
      %2160 = vmatmul.f32.gmra.mxu0 %v1761
      %v2161 = vpop.f32.mrf.mxu0
      %v2162 = vadd.f32 %v1538, %v2161
      %2163 = vmatmul.f32.gmra.mxu0 %v1764
      %v2164 = vpop.f32.mrf.mxu0
      %v2165 = vadd.f32 %v1538, %v2164
      %2166 = vmatmul.f32.gmra.mxu0 %v1767
      %v2167 = vpop.f32.mrf.mxu0
      %v2168 = vadd.f32 %v1538, %v2167
      %2169 = vmatmul.f32.gmra.mxu0 %v1770
      %v2170 = vpop.f32.mrf.mxu0
      %v2171 = vadd.f32 %v1538, %v2170
      %2172 = vmatmul.f32.gmra.mxu0 %v1773
      %v2173 = vpop.f32.mrf.mxu0
      %v2174 = vadd.f32 %v1538, %v2173
      %2175 = vmatmul.f32.gmra.mxu0 %v1776
      %v2176 = vpop.f32.mrf.mxu0
      %v2177 = vadd.f32 %v1538, %v2176
      %2178 = vmatmul.f32.gmra.mxu0 %v1779
      %v2179 = vpop.f32.mrf.mxu0
      %v2180 = vadd.f32 %v1538, %v2179
      %2181 = vmatmul.f32.gmra.mxu0 %v1782
      %v2182 = vpop.f32.mrf.mxu0
      %v2183 = vadd.f32 %v1538, %v2182
      %2184 = vmatmul.f32.gmra.mxu0 %v1785
      %v2185 = vpop.f32.mrf.mxu0
      %v2186 = vadd.f32 %v1538, %v2185
      %2187 = vmatmul.f32.gmra.mxu0 %v1788
      %v2188 = vpop.f32.mrf.mxu0
      %v2189 = vadd.f32 %v1538, %v2188
      %2190 = vmatmul.f32.gmra.mxu0 %v1791
      %v2191 = vpop.f32.mrf.mxu0
      %v2192 = vadd.f32 %v1538, %v2191
      %2193 = vmatmul.f32.gmra.mxu0 %v1794
      %v2194 = vpop.f32.mrf.mxu0
      %v2195 = vadd.f32 %v1538, %v2194
      %2196 = vmatmul.f32.gmra.mxu0 %v1797
      %v2197 = vpop.f32.mrf.mxu0
      %v2198 = vadd.f32 %v1538, %v2197
      %2199 = vmatmul.f32.gmra.mxu0 %v1800
      %v2200 = vpop.f32.mrf.mxu0
      %v2201 = vadd.f32 %v1538, %v2200
      %2202 = vmatmul.f32.gmra.mxu0 %v1803
      %v2203 = vpop.f32.mrf.mxu0
      %v2204 = vadd.f32 %v1538, %v2203
      %2205 = vmatmul.f32.gmra.mxu0 %v1806
      %v2206 = vpop.f32.mrf.mxu0
      %v2207 = vadd.f32 %v1538, %v2206
      %2208 = vmatmul.f32.gmra.mxu0 %v1809
      %v2209 = vpop.f32.mrf.mxu0
      %v2210 = vadd.f32 %v1538, %v2209
      %2211 = vmatmul.f32.gmra.mxu0 %v1812
      %v2212 = vpop.f32.mrf.mxu0
      %v2213 = vadd.f32 %v1538, %v2212
      %2214 = vmatmul.f32.gmra.mxu0 %v1815
      %v2215 = vpop.f32.mrf.mxu0
      %v2216 = vadd.f32 %v1538, %v2215
      %2217 = vmatmul.f32.gmra.mxu0 %v1818
      %v2218 = vpop.f32.mrf.mxu0
      %v2219 = vadd.f32 %v1538, %v2218
      %2220 = vmatmul.f32.gmra.mxu0 %v1821
      %v2221 = vpop.f32.mrf.mxu0
      %v2222 = vadd.f32 %v1538, %v2221
      %2223 = vmatmul.f32.gmra.mxu0 %v1824
      %v2224 = vpop.f32.mrf.mxu0
      %v2225 = vadd.f32 %v1538, %v2224
      %2226 = vmatmul.f32.gmra.mxu0 %v1827
      %v2227 = vpop.f32.mrf.mxu0
      %v2228 = vadd.f32 %v1538, %v2227
      %2229 = vmatmul.f32.gmra.mxu0 %v1830
      %v2230 = vpop.f32.mrf.mxu0
      %v2231 = vadd.f32 %v1538, %v2230
      %2232 = vmatmul.f32.gmra.mxu0 %v1833
      %v2233 = vpop.f32.mrf.mxu0
      %v2234 = vadd.f32 %v1538, %v2233
      %2235 = vmatmul.f32.gmra.mxu0 %v1836
      %v2236 = vpop.f32.mrf.mxu0
      %v2237 = vadd.f32 %v1538, %v2236
      %2238 = vmatmul.f32.gmra.mxu0 %v1839
      %v2239 = vpop.f32.mrf.mxu0
      %v2240 = vadd.f32 %v1538, %v2239
      %2241 = vmatmul.f32.gmra.mxu0 %v1842
      %v2242 = vpop.f32.mrf.mxu0
      %v2243 = vadd.f32 %v1538, %v2242
      %2244 = vmatmul.f32.gmra.mxu0 %v1845
      %v2245 = vpop.f32.mrf.mxu0
      %v2246 = vadd.f32 %v1538, %v2245
      %2247 = vmatmul.f32.gmra.mxu0 %v1848
      %v2248 = vpop.f32.mrf.mxu0
      %v2249 = vadd.f32 %v1538, %v2248
      %2250 = vmatmul.f32.gmra.mxu0 %v1851
      %v2251 = vpop.f32.mrf.mxu0
      %v2252 = vadd.f32 %v1538, %v2251
      %2253 = vmatmul.f32.gmra.mxu0 %v1854
      %v2254 = vpop.f32.mrf.mxu0
      %v2255 = vadd.f32 %v1538, %v2254
      %2256 = vmatmul.f32.gmra.mxu0 %v1857
      %v2257 = vpop.f32.mrf.mxu0
      %v2258 = vadd.f32 %v1538, %v2257
      %2259 = vmatmul.f32.gmra.mxu0 %v1860
      %v2260 = vpop.f32.mrf.mxu0
      %v2261 = vadd.f32 %v1538, %v2260
      %2262 = vmatmul.f32.gmra.mxu0 %v1863
      %v2263 = vpop.f32.mrf.mxu0
      %v2264 = vadd.f32 %v1538, %v2263
      %2265 = vmatmul.f32.gmra.mxu0 %v1866
      %v2266 = vpop.f32.mrf.mxu0
      %v2267 = vadd.f32 %v1538, %v2266
      %2268 = vmatmul.f32.gmra.mxu0 %v1869
      %v2269 = vpop.f32.mrf.mxu0
      %v2270 = vadd.f32 %v1538, %v2269
      %2271 = vmatmul.f32.gmra.mxu0 %v1872
      %v2272 = vpop.f32.mrf.mxu0
      %v2273 = vadd.f32 %v1538, %v2272
      %2274 = vmatmul.f32.gmra.mxu0 %v1875
      %v2275 = vpop.f32.mrf.mxu0
      %v2276 = vadd.f32 %v1538, %v2275
      %2277 = vmatmul.f32.gmra.mxu0 %v1878
      %v2278 = vpop.f32.mrf.mxu0
      %v2279 = vadd.f32 %v1538, %v2278
      %2280 = vmatmul.f32.gmra.mxu0 %v1881
      %v2281 = vpop.f32.mrf.mxu0
      %v2282 = vadd.f32 %v1538, %v2281
      %2283 = vmatmul.f32.gmra.mxu0 %v1884
      %v2284 = vpop.f32.mrf.mxu0
      %v2285 = vadd.f32 %v1538, %v2284
      %2286 = vmatmul.f32.gmra.mxu0 %v1887
      %v2287 = vpop.f32.mrf.mxu0
      %v2288 = vadd.f32 %v1538, %v2287
      %2289 = vmatmul.f32.gmra.mxu0 %v1890
      %v2290 = vpop.f32.mrf.mxu0
      %v2291 = vadd.f32 %v1538, %v2290
      %2292 = vmatmul.f32.gmra.mxu0 %v1893
      %v2293 = vpop.f32.mrf.mxu0
      %v2294 = vadd.f32 %v1538, %v2293
      %2295 = vmatmul.f32.gmra.mxu0 %v1896
      %v2296 = vpop.f32.mrf.mxu0
      %v2297 = vadd.f32 %v1538, %v2296
      %2298 = vmatmul.f32.gmra.mxu0 %v1899
      %v2299 = vpop.f32.mrf.mxu0
      %v2300 = vadd.f32 %v1538, %v2299
      %2301 = vmatmul.f32.gmra.mxu0 %v1902
      %v2302 = vpop.f32.mrf.mxu0
      %v2303 = vadd.f32 %v1538, %v2302
      %2304 = vmatmul.f32.gmra.mxu0 %v1905
      %v2305 = vpop.f32.mrf.mxu0
      %v2306 = vadd.f32 %v1538, %v2305
      %2307 = vmatmul.f32.gmra.mxu0 %v1908
      %v2308 = vpop.f32.mrf.mxu0
      %v2309 = vadd.f32 %v1538, %v2308
      %2310 = vmatmul.f32.gmra.mxu0 %v1911
      %v2311 = vpop.f32.mrf.mxu0
      %v2312 = vadd.f32 %v1538, %v2311
      %2313 = vmatmul.f32.gmra.mxu0 %v1914
      %v2314 = vpop.f32.mrf.mxu0
      %v2315 = vadd.f32 %v1538, %v2314
      %2316 = vmatmul.f32.gmra.mxu0 %v1917
      %v2317 = vpop.f32.mrf.mxu0
      %v2318 = vadd.f32 %v1538, %v2317
      %2319 = vmatmul.f32.gmra.mxu0 %v1920
      %v2320 = vpop.f32.mrf.mxu0
      %v2321 = vadd.f32 %v1538, %v2320
      %2322 = vmatmul.f32.gmra.mxu0 %v1923
      %v2323 = vpop.f32.mrf.mxu0
      %v2324 = vadd.f32 %v1538, %v2323
      %2325 = vdwg.mxu0
      %vm2326 = vcmp.gt.f32.partialorder %v1943, 0.0
      %vm2327 = vcmp.gt.f32.partialorder %v1946, 0.0
      %vm2328 = vcmp.gt.f32.partialorder %v1949, 0.0
      %vm2329 = vcmp.gt.f32.partialorder %v1952, 0.0
      %vm2330 = vcmp.gt.f32.partialorder %v1955, 0.0
      %vm2331 = vcmp.gt.f32.partialorder %v1958, 0.0
      %vm2332 = vcmp.gt.f32.partialorder %v1961, 0.0
      %vm2333 = vcmp.gt.f32.partialorder %v1964, 0.0
      %vm2334 = vcmp.gt.f32.partialorder %v1967, 0.0
      %vm2335 = vcmp.gt.f32.partialorder %v1970, 0.0
      %vm2336 = vcmp.gt.f32.partialorder %v1973, 0.0
      %vm2337 = vcmp.gt.f32.partialorder %v1976, 0.0
      %vm2338 = vcmp.gt.f32.partialorder %v1979, 0.0
      %vm2339 = vcmp.gt.f32.partialorder %v1982, 0.0
      %vm2340 = vcmp.gt.f32.partialorder %v1985, 0.0
      %vm2341 = vcmp.gt.f32.partialorder %v1988, 0.0
      %vm2342 = vcmp.gt.f32.partialorder %v1991, 0.0
      %vm2343 = vcmp.gt.f32.partialorder %v1994, 0.0
      %vm2344 = vcmp.gt.f32.partialorder %v1997, 0.0
      %vm2345 = vcmp.gt.f32.partialorder %v2000, 0.0
      %vm2346 = vcmp.gt.f32.partialorder %v2003, 0.0
      %vm2347 = vcmp.gt.f32.partialorder %v2006, 0.0
      %vm2348 = vcmp.gt.f32.partialorder %v2009, 0.0
      %vm2349 = vcmp.gt.f32.partialorder %v2012, 0.0
      %vm2350 = vcmp.gt.f32.partialorder %v2015, 0.0
      %vm2351 = vcmp.gt.f32.partialorder %v2018, 0.0
      %vm2352 = vcmp.gt.f32.partialorder %v2021, 0.0
      %vm2353 = vcmp.gt.f32.partialorder %v2024, 0.0
      %vm2354 = vcmp.gt.f32.partialorder %v2027, 0.0
      %vm2355 = vcmp.gt.f32.partialorder %v2030, 0.0
      %vm2356 = vcmp.gt.f32.partialorder %v2033, 0.0
      %vm2357 = vcmp.gt.f32.partialorder %v2036, 0.0
      %vm2358 = vcmp.gt.f32.partialorder %v2039, 0.0
      %vm2359 = vcmp.gt.f32.partialorder %v2042, 0.0
      %vm2360 = vcmp.gt.f32.partialorder %v2045, 0.0
      %vm2361 = vcmp.gt.f32.partialorder %v2048, 0.0
      %vm2362 = vcmp.gt.f32.partialorder %v2051, 0.0
      %vm2363 = vcmp.gt.f32.partialorder %v2054, 0.0
      %vm2364 = vcmp.gt.f32.partialorder %v2057, 0.0
      %vm2365 = vcmp.gt.f32.partialorder %v2060, 0.0
      %vm2366 = vcmp.gt.f32.partialorder %v2063, 0.0
      %vm2367 = vcmp.gt.f32.partialorder %v2066, 0.0
      %vm2368 = vcmp.gt.f32.partialorder %v2069, 0.0
      %vm2369 = vcmp.gt.f32.partialorder %v2072, 0.0
      %vm2370 = vcmp.gt.f32.partialorder %v2075, 0.0
      %vm2371 = vcmp.gt.f32.partialorder %v2078, 0.0
      %vm2372 = vcmp.gt.f32.partialorder %v2081, 0.0
      %vm2373 = vcmp.gt.f32.partialorder %v2084, 0.0
      %vm2374 = vcmp.gt.f32.partialorder %v2087, 0.0
      %vm2375 = vcmp.gt.f32.partialorder %v2090, 0.0
      %vm2376 = vcmp.gt.f32.partialorder %v2093, 0.0
      %vm2377 = vcmp.gt.f32.partialorder %v2096, 0.0
      %vm2378 = vcmp.gt.f32.partialorder %v2099, 0.0
      %vm2379 = vcmp.gt.f32.partialorder %v2102, 0.0
      %vm2380 = vcmp.gt.f32.partialorder %v2105, 0.0
      %vm2381 = vcmp.gt.f32.partialorder %v2108, 0.0
      %vm2382 = vcmp.gt.f32.partialorder %v2111, 0.0
      %vm2383 = vcmp.gt.f32.partialorder %v2114, 0.0
      %vm2384 = vcmp.gt.f32.partialorder %v2117, 0.0
      %vm2385 = vcmp.gt.f32.partialorder %v2120, 0.0
      %vm2386 = vcmp.gt.f32.partialorder %v2123, 0.0
      %vm2387 = vcmp.gt.f32.partialorder %v2126, 0.0
      %vm2388 = vcmp.gt.f32.partialorder %v2129, 0.0
      %vm2389 = vcmp.gt.f32.partialorder %v2132, 0.0
      %vm2390 = vcmp.gt.f32.partialorder %v2135, 0.0
      %vm2391 = vcmp.gt.f32.partialorder %v2138, 0.0
      %vm2392 = vcmp.gt.f32.partialorder %v2141, 0.0
      %vm2393 = vcmp.gt.f32.partialorder %v2144, 0.0
      %vm2394 = vcmp.gt.f32.partialorder %v2147, 0.0
      %vm2395 = vcmp.gt.f32.partialorder %v2150, 0.0
      %vm2396 = vcmp.gt.f32.partialorder %v2153, 0.0
      %vm2397 = vcmp.gt.f32.partialorder %v2156, 0.0
      %vm2398 = vcmp.gt.f32.partialorder %v2159, 0.0
      %vm2399 = vcmp.gt.f32.partialorder %v2162, 0.0
      %vm2400 = vcmp.gt.f32.partialorder %v2165, 0.0
      %vm2401 = vcmp.gt.f32.partialorder %v2168, 0.0
      %vm2402 = vcmp.gt.f32.partialorder %v2171, 0.0
      %vm2403 = vcmp.gt.f32.partialorder %v2174, 0.0
      %vm2404 = vcmp.gt.f32.partialorder %v2177, 0.0
      %vm2405 = vcmp.gt.f32.partialorder %v2180, 0.0
      %vm2406 = vcmp.gt.f32.partialorder %v2183, 0.0
      %vm2407 = vcmp.gt.f32.partialorder %v2186, 0.0
      %vm2408 = vcmp.gt.f32.partialorder %v2189, 0.0
      %vm2409 = vcmp.gt.f32.partialorder %v2192, 0.0
      %vm2410 = vcmp.gt.f32.partialorder %v2195, 0.0
      %vm2411 = vcmp.gt.f32.partialorder %v2198, 0.0
      %vm2412 = vcmp.gt.f32.partialorder %v2201, 0.0
      %vm2413 = vcmp.gt.f32.partialorder %v2204, 0.0
      %vm2414 = vcmp.gt.f32.partialorder %v2207, 0.0
      %vm2415 = vcmp.gt.f32.partialorder %v2210, 0.0
      %vm2416 = vcmp.gt.f32.partialorder %v2213, 0.0
      %vm2417 = vcmp.gt.f32.partialorder %v2216, 0.0
      %vm2418 = vcmp.gt.f32.partialorder %v2219, 0.0
      %vm2419 = vcmp.gt.f32.partialorder %v2222, 0.0
      %vm2420 = vcmp.gt.f32.partialorder %v2225, 0.0
      %vm2421 = vcmp.gt.f32.partialorder %v2228, 0.0
      %vm2422 = vcmp.gt.f32.partialorder %v2231, 0.0
      %vm2423 = vcmp.gt.f32.partialorder %v2234, 0.0
      %vm2424 = vcmp.gt.f32.partialorder %v2237, 0.0
      %vm2425 = vcmp.gt.f32.partialorder %v2240, 0.0
      %vm2426 = vcmp.gt.f32.partialorder %v2243, 0.0
      %vm2427 = vcmp.gt.f32.partialorder %v2246, 0.0
      %vm2428 = vcmp.gt.f32.partialorder %v2249, 0.0
      %vm2429 = vcmp.gt.f32.partialorder %v2252, 0.0
      %vm2430 = vcmp.gt.f32.partialorder %v2255, 0.0
      %vm2431 = vcmp.gt.f32.partialorder %v2258, 0.0
      %vm2432 = vcmp.gt.f32.partialorder %v2261, 0.0
      %vm2433 = vcmp.gt.f32.partialorder %v2264, 0.0
      %vm2434 = vcmp.gt.f32.partialorder %v2267, 0.0
      %vm2435 = vcmp.gt.f32.partialorder %v2270, 0.0
      %vm2436 = vcmp.gt.f32.partialorder %v2273, 0.0
      %vm2437 = vcmp.gt.f32.partialorder %v2276, 0.0
      %vm2438 = vcmp.gt.f32.partialorder %v2279, 0.0
      %vm2439 = vcmp.gt.f32.partialorder %v2282, 0.0
      %vm2440 = vcmp.gt.f32.partialorder %v2285, 0.0
      %vm2441 = vcmp.gt.f32.partialorder %v2288, 0.0
      %vm2442 = vcmp.gt.f32.partialorder %v2291, 0.0
      %vm2443 = vcmp.gt.f32.partialorder %v2294, 0.0
      %vm2444 = vcmp.gt.f32.partialorder %v2297, 0.0
      %vm2445 = vcmp.gt.f32.partialorder %v2300, 0.0
      %vm2446 = vcmp.gt.f32.partialorder %v2303, 0.0
      %vm2447 = vcmp.gt.f32.partialorder %v2306, 0.0
      %vm2448 = vcmp.gt.f32.partialorder %v2309, 0.0
      %vm2449 = vcmp.gt.f32.partialorder %v2312, 0.0
      %vm2450 = vcmp.gt.f32.partialorder %v2315, 0.0
      %vm2451 = vcmp.gt.f32.partialorder %v2318, 0.0
      %vm2452 = vcmp.gt.f32.partialorder %v2321, 0.0
      %vm2453 = vcmp.gt.f32.partialorder %v2324, 0.0
      %v2454 = vmul.f32 %v1943, 0.01
      %v2455 = vmul.f32 %v1946, 0.01
      %v2456 = vmul.f32 %v1949, 0.01
      %v2457 = vmul.f32 %v1952, 0.01
      %v2458 = vmul.f32 %v1955, 0.01
      %v2459 = vmul.f32 %v1958, 0.01
      %v2460 = vmul.f32 %v1961, 0.01
      %v2461 = vmul.f32 %v1964, 0.01
      %v2462 = vmul.f32 %v1967, 0.01
      %v2463 = vmul.f32 %v1970, 0.01
      %v2464 = vmul.f32 %v1973, 0.01
      %v2465 = vmul.f32 %v1976, 0.01
      %v2466 = vmul.f32 %v1979, 0.01
      %v2467 = vmul.f32 %v1982, 0.01
      %v2468 = vmul.f32 %v1985, 0.01
      %v2469 = vmul.f32 %v1988, 0.01
      %v2470 = vmul.f32 %v1991, 0.01
      %v2471 = vmul.f32 %v1994, 0.01
      %v2472 = vmul.f32 %v1997, 0.01
      %v2473 = vmul.f32 %v2000, 0.01
      %v2474 = vmul.f32 %v2003, 0.01
      %v2475 = vmul.f32 %v2006, 0.01
      %v2476 = vmul.f32 %v2009, 0.01
      %v2477 = vmul.f32 %v2012, 0.01
      %v2478 = vmul.f32 %v2015, 0.01
      %v2479 = vmul.f32 %v2018, 0.01
      %v2480 = vmul.f32 %v2021, 0.01
      %v2481 = vmul.f32 %v2024, 0.01
      %v2482 = vmul.f32 %v2027, 0.01
      %v2483 = vmul.f32 %v2030, 0.01
      %v2484 = vmul.f32 %v2033, 0.01
      %v2485 = vmul.f32 %v2036, 0.01
      %v2486 = vmul.f32 %v2039, 0.01
      %v2487 = vmul.f32 %v2042, 0.01
      %v2488 = vmul.f32 %v2045, 0.01
      %v2489 = vmul.f32 %v2048, 0.01
      %v2490 = vmul.f32 %v2051, 0.01
      %v2491 = vmul.f32 %v2054, 0.01
      %v2492 = vmul.f32 %v2057, 0.01
      %v2493 = vmul.f32 %v2060, 0.01
      %v2494 = vmul.f32 %v2063, 0.01
      %v2495 = vmul.f32 %v2066, 0.01
      %v2496 = vmul.f32 %v2069, 0.01
      %v2497 = vmul.f32 %v2072, 0.01
      %v2498 = vmul.f32 %v2075, 0.01
      %v2499 = vmul.f32 %v2078, 0.01
      %v2500 = vmul.f32 %v2081, 0.01
      %v2501 = vmul.f32 %v2084, 0.01
      %v2502 = vmul.f32 %v2087, 0.01
      %v2503 = vmul.f32 %v2090, 0.01
      %v2504 = vmul.f32 %v2093, 0.01
      %v2505 = vmul.f32 %v2096, 0.01
      %v2506 = vmul.f32 %v2099, 0.01
      %v2507 = vmul.f32 %v2102, 0.01
      %v2508 = vmul.f32 %v2105, 0.01
      %v2509 = vmul.f32 %v2108, 0.01
      %v2510 = vmul.f32 %v2111, 0.01
      %v2511 = vmul.f32 %v2114, 0.01
      %v2512 = vmul.f32 %v2117, 0.01
      %v2513 = vmul.f32 %v2120, 0.01
      %v2514 = vmul.f32 %v2123, 0.01
      %v2515 = vmul.f32 %v2126, 0.01
      %v2516 = vmul.f32 %v2129, 0.01
      %v2517 = vmul.f32 %v2132, 0.01
      %v2518 = vmul.f32 %v2135, 0.01
      %v2519 = vmul.f32 %v2138, 0.01
      %v2520 = vmul.f32 %v2141, 0.01
      %v2521 = vmul.f32 %v2144, 0.01
      %v2522 = vmul.f32 %v2147, 0.01
      %v2523 = vmul.f32 %v2150, 0.01
      %v2524 = vmul.f32 %v2153, 0.01
      %v2525 = vmul.f32 %v2156, 0.01
      %v2526 = vmul.f32 %v2159, 0.01
      %v2527 = vmul.f32 %v2162, 0.01
      %v2528 = vmul.f32 %v2165, 0.01
      %v2529 = vmul.f32 %v2168, 0.01
      %v2530 = vmul.f32 %v2171, 0.01
      %v2531 = vmul.f32 %v2174, 0.01
      %v2532 = vmul.f32 %v2177, 0.01
      %v2533 = vmul.f32 %v2180, 0.01
      %v2534 = vmul.f32 %v2183, 0.01
      %v2535 = vmul.f32 %v2186, 0.01
      %v2536 = vmul.f32 %v2189, 0.01
      %v2537 = vmul.f32 %v2192, 0.01
      %v2538 = vmul.f32 %v2195, 0.01
      %v2539 = vmul.f32 %v2198, 0.01
      %v2540 = vmul.f32 %v2201, 0.01
      %v2541 = vmul.f32 %v2204, 0.01
      %v2542 = vmul.f32 %v2207, 0.01
      %v2543 = vmul.f32 %v2210, 0.01
      %v2544 = vmul.f32 %v2213, 0.01
      %v2545 = vmul.f32 %v2216, 0.01
      %v2546 = vmul.f32 %v2219, 0.01
      %v2547 = vmul.f32 %v2222, 0.01
      %v2548 = vmul.f32 %v2225, 0.01
      %v2549 = vmul.f32 %v2228, 0.01
      %v2550 = vmul.f32 %v2231, 0.01
      %v2551 = vmul.f32 %v2234, 0.01
      %v2552 = vmul.f32 %v2237, 0.01
      %v2553 = vmul.f32 %v2240, 0.01
      %v2554 = vmul.f32 %v2243, 0.01
      %v2555 = vmul.f32 %v2246, 0.01
      %v2556 = vmul.f32 %v2249, 0.01
      %v2557 = vmul.f32 %v2252, 0.01
      %v2558 = vmul.f32 %v2255, 0.01
      %v2559 = vmul.f32 %v2258, 0.01
      %v2560 = vmul.f32 %v2261, 0.01
      %v2561 = vmul.f32 %v2264, 0.01
      %v2562 = vmul.f32 %v2267, 0.01
      %v2563 = vmul.f32 %v2270, 0.01
      %v2564 = vmul.f32 %v2273, 0.01
      %v2565 = vmul.f32 %v2276, 0.01
      %v2566 = vmul.f32 %v2279, 0.01
      %v2567 = vmul.f32 %v2282, 0.01
      %v2568 = vmul.f32 %v2285, 0.01
      %v2569 = vmul.f32 %v2288, 0.01
      %v2570 = vmul.f32 %v2291, 0.01
      %v2571 = vmul.f32 %v2294, 0.01
      %v2572 = vmul.f32 %v2297, 0.01
      %v2573 = vmul.f32 %v2300, 0.01
      %v2574 = vmul.f32 %v2303, 0.01
      %v2575 = vmul.f32 %v2306, 0.01
      %v2576 = vmul.f32 %v2309, 0.01
      %v2577 = vmul.f32 %v2312, 0.01
      %v2578 = vmul.f32 %v2315, 0.01
      %v2579 = vmul.f32 %v2318, 0.01
      %v2580 = vmul.f32 %v2321, 0.01
      %v2581 = vmul.f32 %v2324, 0.01
      %v2582 = vsel %vm2326, %v1943, %v2454
      %v2583 = vsel %vm2327, %v1946, %v2455
      %v2584 = vsel %vm2328, %v1949, %v2456
      %v2585 = vsel %vm2329, %v1952, %v2457
      %v2586 = vsel %vm2330, %v1955, %v2458
      %v2587 = vsel %vm2331, %v1958, %v2459
      %v2588 = vsel %vm2332, %v1961, %v2460
      %v2589 = vsel %vm2333, %v1964, %v2461
      %v2590 = vsel %vm2334, %v1967, %v2462
      %v2591 = vsel %vm2335, %v1970, %v2463
      %v2592 = vsel %vm2336, %v1973, %v2464
      %v2593 = vsel %vm2337, %v1976, %v2465
      %v2594 = vsel %vm2338, %v1979, %v2466
      %v2595 = vsel %vm2339, %v1982, %v2467
      %v2596 = vsel %vm2340, %v1985, %v2468
      %v2597 = vsel %vm2341, %v1988, %v2469
      %v2598 = vsel %vm2342, %v1991, %v2470
      %v2599 = vsel %vm2343, %v1994, %v2471
      %v2600 = vsel %vm2344, %v1997, %v2472
      %v2601 = vsel %vm2345, %v2000, %v2473
      %v2602 = vsel %vm2346, %v2003, %v2474
      %v2603 = vsel %vm2347, %v2006, %v2475
      %v2604 = vsel %vm2348, %v2009, %v2476
      %v2605 = vsel %vm2349, %v2012, %v2477
      %v2606 = vsel %vm2350, %v2015, %v2478
      %v2607 = vsel %vm2351, %v2018, %v2479
      %v2608 = vsel %vm2352, %v2021, %v2480
      %v2609 = vsel %vm2353, %v2024, %v2481
      %v2610 = vsel %vm2354, %v2027, %v2482
      %v2611 = vsel %vm2355, %v2030, %v2483
      %v2612 = vsel %vm2356, %v2033, %v2484
      %v2613 = vsel %vm2357, %v2036, %v2485
      %v2614 = vsel %vm2358, %v2039, %v2486
      %v2615 = vsel %vm2359, %v2042, %v2487
      %v2616 = vsel %vm2360, %v2045, %v2488
      %v2617 = vsel %vm2361, %v2048, %v2489
      %v2618 = vsel %vm2362, %v2051, %v2490
      %v2619 = vsel %vm2363, %v2054, %v2491
      %v2620 = vsel %vm2364, %v2057, %v2492
      %v2621 = vsel %vm2365, %v2060, %v2493
      %v2622 = vsel %vm2366, %v2063, %v2494
      %v2623 = vsel %vm2367, %v2066, %v2495
      %v2624 = vsel %vm2368, %v2069, %v2496
      %v2625 = vsel %vm2369, %v2072, %v2497
      %v2626 = vsel %vm2370, %v2075, %v2498
      %v2627 = vsel %vm2371, %v2078, %v2499
      %v2628 = vsel %vm2372, %v2081, %v2500
      %v2629 = vsel %vm2373, %v2084, %v2501
      %v2630 = vsel %vm2374, %v2087, %v2502
      %v2631 = vsel %vm2375, %v2090, %v2503
      %v2632 = vsel %vm2376, %v2093, %v2504
      %v2633 = vsel %vm2377, %v2096, %v2505
      %v2634 = vsel %vm2378, %v2099, %v2506
      %v2635 = vsel %vm2379, %v2102, %v2507
      %v2636 = vsel %vm2380, %v2105, %v2508
      %v2637 = vsel %vm2381, %v2108, %v2509
      %v2638 = vsel %vm2382, %v2111, %v2510
      %v2639 = vsel %vm2383, %v2114, %v2511
      %v2640 = vsel %vm2384, %v2117, %v2512
      %v2641 = vsel %vm2385, %v2120, %v2513
      %v2642 = vsel %vm2386, %v2123, %v2514
      %v2643 = vsel %vm2387, %v2126, %v2515
      %v2644 = vsel %vm2388, %v2129, %v2516
      %v2645 = vsel %vm2389, %v2132, %v2517
      %v2646 = vsel %vm2390, %v2135, %v2518
      %v2647 = vsel %vm2391, %v2138, %v2519
      %v2648 = vsel %vm2392, %v2141, %v2520
      %v2649 = vsel %vm2393, %v2144, %v2521
      %v2650 = vsel %vm2394, %v2147, %v2522
      %v2651 = vsel %vm2395, %v2150, %v2523
      %v2652 = vsel %vm2396, %v2153, %v2524
      %v2653 = vsel %vm2397, %v2156, %v2525
      %v2654 = vsel %vm2398, %v2159, %v2526
      %v2655 = vsel %vm2399, %v2162, %v2527
      %v2656 = vsel %vm2400, %v2165, %v2528
      %v2657 = vsel %vm2401, %v2168, %v2529
      %v2658 = vsel %vm2402, %v2171, %v2530
      %v2659 = vsel %vm2403, %v2174, %v2531
      %v2660 = vsel %vm2404, %v2177, %v2532
      %v2661 = vsel %vm2405, %v2180, %v2533
      %v2662 = vsel %vm2406, %v2183, %v2534
      %v2663 = vsel %vm2407, %v2186, %v2535
      %v2664 = vsel %vm2408, %v2189, %v2536
      %v2665 = vsel %vm2409, %v2192, %v2537
      %v2666 = vsel %vm2410, %v2195, %v2538
      %v2667 = vsel %vm2411, %v2198, %v2539
      %v2668 = vsel %vm2412, %v2201, %v2540
      %v2669 = vsel %vm2413, %v2204, %v2541
      %v2670 = vsel %vm2414, %v2207, %v2542
      %v2671 = vsel %vm2415, %v2210, %v2543
      %v2672 = vsel %vm2416, %v2213, %v2544
      %v2673 = vsel %vm2417, %v2216, %v2545
      %v2674 = vsel %vm2418, %v2219, %v2546
      %v2675 = vsel %vm2419, %v2222, %v2547
      %v2676 = vsel %vm2420, %v2225, %v2548
      %v2677 = vsel %vm2421, %v2228, %v2549
      %v2678 = vsel %vm2422, %v2231, %v2550
      %v2679 = vsel %vm2423, %v2234, %v2551
      %v2680 = vsel %vm2424, %v2237, %v2552
      %v2681 = vsel %vm2425, %v2240, %v2553
      %v2682 = vsel %vm2426, %v2243, %v2554
      %v2683 = vsel %vm2427, %v2246, %v2555
      %v2684 = vsel %vm2428, %v2249, %v2556
      %v2685 = vsel %vm2429, %v2252, %v2557
      %v2686 = vsel %vm2430, %v2255, %v2558
      %v2687 = vsel %vm2431, %v2258, %v2559
      %v2688 = vsel %vm2432, %v2261, %v2560
      %v2689 = vsel %vm2433, %v2264, %v2561
      %v2690 = vsel %vm2434, %v2267, %v2562
      %v2691 = vsel %vm2435, %v2270, %v2563
      %v2692 = vsel %vm2436, %v2273, %v2564
      %v2693 = vsel %vm2437, %v2276, %v2565
      %v2694 = vsel %vm2438, %v2279, %v2566
      %v2695 = vsel %vm2439, %v2282, %v2567
      %v2696 = vsel %vm2440, %v2285, %v2568
      %v2697 = vsel %vm2441, %v2288, %v2569
      %v2698 = vsel %vm2442, %v2291, %v2570
      %v2699 = vsel %vm2443, %v2294, %v2571
      %v2700 = vsel %vm2444, %v2297, %v2572
      %v2701 = vsel %vm2445, %v2300, %v2573
      %v2702 = vsel %vm2446, %v2303, %v2574
      %v2703 = vsel %vm2447, %v2306, %v2575
      %v2704 = vsel %vm2448, %v2309, %v2576
      %v2705 = vsel %vm2449, %v2312, %v2577
      %v2706 = vsel %vm2450, %v2315, %v2578
      %v2707 = vsel %vm2451, %v2318, %v2579
      %v2708 = vsel %vm2452, %v2321, %v2580
      %v2709 = vsel %vm2453, %v2324, %v2581
      %vm2710 = vcmask 64512
      %2711 = vst.msk [vmem:[%s226] sm:$0xff] %vm2710, %v2582
      %2712 = vst.msk [vmem:[%s226 + $0x8] sm:$0xff] %vm2710, %v2583
      %2713 = vst.msk [vmem:[%s226 + $0x10] sm:$0xff] %vm2710, %v2584
      %2714 = vst.msk [vmem:[%s226 + $0x18] sm:$0xff] %vm2710, %v2585
      %2715 = vst.msk [vmem:[%s226 + $0x20] sm:$0xff] %vm2710, %v2586
      %2716 = vst.msk [vmem:[%s226 + $0x28] sm:$0xff] %vm2710, %v2587
      %2717 = vst.msk [vmem:[%s226 + $0x30] sm:$0xff] %vm2710, %v2588
      %2718 = vst.msk [vmem:[%s226 + $0x38] sm:$0xff] %vm2710, %v2589
      %2719 = vst.msk [vmem:[%s226 + $0x40] sm:$0xff] %vm2710, %v2590
      %2720 = vst.msk [vmem:[%s226 + $0x48] sm:$0xff] %vm2710, %v2591
      %2721 = vst.msk [vmem:[%s226 + $0x50] sm:$0xff] %vm2710, %v2592
      %2722 = vst.msk [vmem:[%s226 + $0x58] sm:$0xff] %vm2710, %v2593
      %2723 = vst.msk [vmem:[%s226 + $0x60] sm:$0xff] %vm2710, %v2594
      %2724 = vst.msk [vmem:[%s226 + $0x68] sm:$0xff] %vm2710, %v2595
      %2725 = vst.msk [vmem:[%s226 + $0x70] sm:$0xff] %vm2710, %v2596
      %2726 = vst.msk [vmem:[%s226 + $0x78] sm:$0xff] %vm2710, %v2597
      %2727 = vst.msk [vmem:[%s226 + $0x80] sm:$0xff] %vm2710, %v2598
      %2728 = vst.msk [vmem:[%s226 + $0x88] sm:$0xff] %vm2710, %v2599
      %2729 = vst.msk [vmem:[%s226 + $0x90] sm:$0xff] %vm2710, %v2600
      %2730 = vst.msk [vmem:[%s226 + $0x98] sm:$0xff] %vm2710, %v2601
      %2731 = vst.msk [vmem:[%s226 + $0xa0] sm:$0xff] %vm2710, %v2602
      %2732 = vst.msk [vmem:[%s226 + $0xa8] sm:$0xff] %vm2710, %v2603
      %2733 = vst.msk [vmem:[%s226 + $0xb0] sm:$0xff] %vm2710, %v2604
      %2734 = vst.msk [vmem:[%s226 + $0xb8] sm:$0xff] %vm2710, %v2605
      %2735 = vst.msk [vmem:[%s226 + $0xc0] sm:$0xff] %vm2710, %v2606
      %2736 = vst.msk [vmem:[%s226 + $0xc8] sm:$0xff] %vm2710, %v2607
      %2737 = vst.msk [vmem:[%s226 + $0xd0] sm:$0xff] %vm2710, %v2608
      %2738 = vst.msk [vmem:[%s226 + $0xd8] sm:$0xff] %vm2710, %v2609
      %2739 = vst.msk [vmem:[%s226 + $0xe0] sm:$0xff] %vm2710, %v2610
      %2740 = vst.msk [vmem:[%s226 + $0xe8] sm:$0xff] %vm2710, %v2611
      %2741 = vst.msk [vmem:[%s226 + $0xf0] sm:$0xff] %vm2710, %v2612
      %2742 = vst.msk [vmem:[%s226 + $0xf8] sm:$0xff] %vm2710, %v2613
      %2743 = vst.msk [vmem:[%s226 + $0x100] sm:$0xff] %vm2710, %v2614
      %2744 = vst.msk [vmem:[%s226 + $0x108] sm:$0xff] %vm2710, %v2615
      %2745 = vst.msk [vmem:[%s226 + $0x110] sm:$0xff] %vm2710, %v2616
      %2746 = vst.msk [vmem:[%s226 + $0x118] sm:$0xff] %vm2710, %v2617
      %2747 = vst.msk [vmem:[%s226 + $0x120] sm:$0xff] %vm2710, %v2618
      %2748 = vst.msk [vmem:[%s226 + $0x128] sm:$0xff] %vm2710, %v2619
      %2749 = vst.msk [vmem:[%s226 + $0x130] sm:$0xff] %vm2710, %v2620
      %2750 = vst.msk [vmem:[%s226 + $0x138] sm:$0xff] %vm2710, %v2621
      %2751 = vst.msk [vmem:[%s226 + $0x140] sm:$0xff] %vm2710, %v2622
      %2752 = vst.msk [vmem:[%s226 + $0x148] sm:$0xff] %vm2710, %v2623
      %2753 = vst.msk [vmem:[%s226 + $0x150] sm:$0xff] %vm2710, %v2624
      %2754 = vst.msk [vmem:[%s226 + $0x158] sm:$0xff] %vm2710, %v2625
      %2755 = vst.msk [vmem:[%s226 + $0x160] sm:$0xff] %vm2710, %v2626
      %2756 = vst.msk [vmem:[%s226 + $0x168] sm:$0xff] %vm2710, %v2627
      %2757 = vst.msk [vmem:[%s226 + $0x170] sm:$0xff] %vm2710, %v2628
      %2758 = vst.msk [vmem:[%s226 + $0x178] sm:$0xff] %vm2710, %v2629
      %2759 = vst.msk [vmem:[%s226 + $0x180] sm:$0xff] %vm2710, %v2630
      %2760 = vst.msk [vmem:[%s226 + $0x188] sm:$0xff] %vm2710, %v2631
      %2761 = vst.msk [vmem:[%s226 + $0x190] sm:$0xff] %vm2710, %v2632
      %2762 = vst.msk [vmem:[%s226 + $0x198] sm:$0xff] %vm2710, %v2633
      %2763 = vst.msk [vmem:[%s226 + $0x1a0] sm:$0xff] %vm2710, %v2634
      %2764 = vst.msk [vmem:[%s226 + $0x1a8] sm:$0xff] %vm2710, %v2635
      %2765 = vst.msk [vmem:[%s226 + $0x1b0] sm:$0xff] %vm2710, %v2636
      %2766 = vst.msk [vmem:[%s226 + $0x1b8] sm:$0xff] %vm2710, %v2637
      %2767 = vst.msk [vmem:[%s226 + $0x1c0] sm:$0xff] %vm2710, %v2638
      %2768 = vst.msk [vmem:[%s226 + $0x1c8] sm:$0xff] %vm2710, %v2639
      %2769 = vst.msk [vmem:[%s226 + $0x1d0] sm:$0xff] %vm2710, %v2640
      %2770 = vst.msk [vmem:[%s226 + $0x1d8] sm:$0xff] %vm2710, %v2641
      %2771 = vst.msk [vmem:[%s226 + $0x1e0] sm:$0xff] %vm2710, %v2642
      %2772 = vst.msk [vmem:[%s226 + $0x1e8] sm:$0xff] %vm2710, %v2643
      %2773 = vst.msk [vmem:[%s226 + $0x1f0] sm:$0xff] %vm2710, %v2644
      %2774 = vst.msk [vmem:[%s226 + $0x1f8] sm:$0xff] %vm2710, %v2645
      %2775 = vst.msk [vmem:[%s226 + $0x200] sm:$0xff] %vm2710, %v2646
      %2776 = vst.msk [vmem:[%s226 + $0x208] sm:$0xff] %vm2710, %v2647
      %2777 = vst.msk [vmem:[%s226 + $0x210] sm:$0xff] %vm2710, %v2648
      %2778 = vst.msk [vmem:[%s226 + $0x218] sm:$0xff] %vm2710, %v2649
      %2779 = vst.msk [vmem:[%s226 + $0x220] sm:$0xff] %vm2710, %v2650
      %2780 = vst.msk [vmem:[%s226 + $0x228] sm:$0xff] %vm2710, %v2651
      %2781 = vst.msk [vmem:[%s226 + $0x230] sm:$0xff] %vm2710, %v2652
      %2782 = vst.msk [vmem:[%s226 + $0x238] sm:$0xff] %vm2710, %v2653
      %2783 = vst.msk [vmem:[%s226 + $0x240] sm:$0xff] %vm2710, %v2654
      %2784 = vst.msk [vmem:[%s226 + $0x248] sm:$0xff] %vm2710, %v2655
      %2785 = vst.msk [vmem:[%s226 + $0x250] sm:$0xff] %vm2710, %v2656
      %2786 = vst.msk [vmem:[%s226 + $0x258] sm:$0xff] %vm2710, %v2657
      %2787 = vst.msk [vmem:[%s226 + $0x260] sm:$0xff] %vm2710, %v2658
      %2788 = vst.msk [vmem:[%s226 + $0x268] sm:$0xff] %vm2710, %v2659
      %2789 = vst.msk [vmem:[%s226 + $0x270] sm:$0xff] %vm2710, %v2660
      %2790 = vst.msk [vmem:[%s226 + $0x278] sm:$0xff] %vm2710, %v2661
      %2791 = vst.msk [vmem:[%s226 + $0x280] sm:$0xff] %vm2710, %v2662
      %2792 = vst.msk [vmem:[%s226 + $0x288] sm:$0xff] %vm2710, %v2663
      %2793 = vst.msk [vmem:[%s226 + $0x290] sm:$0xff] %vm2710, %v2664
      %2794 = vst.msk [vmem:[%s226 + $0x298] sm:$0xff] %vm2710, %v2665
      %2795 = vst.msk [vmem:[%s226 + $0x2a0] sm:$0xff] %vm2710, %v2666
      %2796 = vst.msk [vmem:[%s226 + $0x2a8] sm:$0xff] %vm2710, %v2667
      %2797 = vst.msk [vmem:[%s226 + $0x2b0] sm:$0xff] %vm2710, %v2668
      %2798 = vst.msk [vmem:[%s226 + $0x2b8] sm:$0xff] %vm2710, %v2669
      %2799 = vst.msk [vmem:[%s226 + $0x2c0] sm:$0xff] %vm2710, %v2670
      %2800 = vst.msk [vmem:[%s226 + $0x2c8] sm:$0xff] %vm2710, %v2671
      %2801 = vst.msk [vmem:[%s226 + $0x2d0] sm:$0xff] %vm2710, %v2672
      %2802 = vst.msk [vmem:[%s226 + $0x2d8] sm:$0xff] %vm2710, %v2673
      %2803 = vst.msk [vmem:[%s226 + $0x2e0] sm:$0xff] %vm2710, %v2674
      %2804 = vst.msk [vmem:[%s226 + $0x2e8] sm:$0xff] %vm2710, %v2675
      %2805 = vst.msk [vmem:[%s226 + $0x2f0] sm:$0xff] %vm2710, %v2676
      %2806 = vst.msk [vmem:[%s226 + $0x2f8] sm:$0xff] %vm2710, %v2677
      %2807 = vst.msk [vmem:[%s226 + $0x300] sm:$0xff] %vm2710, %v2678
      %2808 = vst.msk [vmem:[%s226 + $0x308] sm:$0xff] %vm2710, %v2679
      %2809 = vst.msk [vmem:[%s226 + $0x310] sm:$0xff] %vm2710, %v2680
      %2810 = vst.msk [vmem:[%s226 + $0x318] sm:$0xff] %vm2710, %v2681
      %2811 = vst.msk [vmem:[%s226 + $0x320] sm:$0xff] %vm2710, %v2682
      %2812 = vst.msk [vmem:[%s226 + $0x328] sm:$0xff] %vm2710, %v2683
      %2813 = vst.msk [vmem:[%s226 + $0x330] sm:$0xff] %vm2710, %v2684
      %2814 = vst.msk [vmem:[%s226 + $0x338] sm:$0xff] %vm2710, %v2685
      %2815 = vst.msk [vmem:[%s226 + $0x340] sm:$0xff] %vm2710, %v2686
      %2816 = vst.msk [vmem:[%s226 + $0x348] sm:$0xff] %vm2710, %v2687
      %2817 = vst.msk [vmem:[%s226 + $0x350] sm:$0xff] %vm2710, %v2688
      %2818 = vst.msk [vmem:[%s226 + $0x358] sm:$0xff] %vm2710, %v2689
      %2819 = vst.msk [vmem:[%s226 + $0x360] sm:$0xff] %vm2710, %v2690
      %2820 = vst.msk [vmem:[%s226 + $0x368] sm:$0xff] %vm2710, %v2691
      %2821 = vst.msk [vmem:[%s226 + $0x370] sm:$0xff] %vm2710, %v2692
      %2822 = vst.msk [vmem:[%s226 + $0x378] sm:$0xff] %vm2710, %v2693
      %2823 = vst.msk [vmem:[%s226 + $0x380] sm:$0xff] %vm2710, %v2694
      %2824 = vst.msk [vmem:[%s226 + $0x388] sm:$0xff] %vm2710, %v2695
      %2825 = vst.msk [vmem:[%s226 + $0x390] sm:$0xff] %vm2710, %v2696
      %2826 = vst.msk [vmem:[%s226 + $0x398] sm:$0xff] %vm2710, %v2697
      %2827 = vst.msk [vmem:[%s226 + $0x3a0] sm:$0xff] %vm2710, %v2698
      %2828 = vst.msk [vmem:[%s226 + $0x3a8] sm:$0xff] %vm2710, %v2699
      %2829 = vst.msk [vmem:[%s226 + $0x3b0] sm:$0xff] %vm2710, %v2700
      %2830 = vst.msk [vmem:[%s226 + $0x3b8] sm:$0xff] %vm2710, %v2701
      %2831 = vst.msk [vmem:[%s226 + $0x3c0] sm:$0xff] %vm2710, %v2702
      %2832 = vst.msk [vmem:[%s226 + $0x3c8] sm:$0xff] %vm2710, %v2703
      %2833 = vst.msk [vmem:[%s226 + $0x3d0] sm:$0xff] %vm2710, %v2704
      %2834 = vst.msk [vmem:[%s226 + $0x3d8] sm:$0xff] %vm2710, %v2705
      %2835 = vst.msk [vmem:[%s226 + $0x3e0] sm:$0xff] %vm2710, %v2706
      %2836 = vst.msk [vmem:[%s226 + $0x3e8] sm:$0xff] %vm2710, %v2707
      %2837 = vst.msk [vmem:[%s226 + $0x3f0] sm:$0xff] %vm2710, %v2708
      %2838 = vst.msk [vmem:[%s226 + $0x3f8] sm:$0xff] %vm2710, %v2709
      %s2839 = smul.u32 128, %s16
      %p2840 = scmp.lt.s32.totalorder %s2839, 511
      %s2841 = scalar_select %p2840, %s2839, 511
      %s2842 = smul.addr %s2841, 8
      %s2843 = scalar_lea.vmem %s5, %s2842
      // Predicated region
      $region41: #{tpu_custom_call.1} parent=39 // pred_check
        %p2844 = pneg %p144
      $region42: #{tpu_custom_call.1} parent=39 // pred_check_branch
        %2846 = sbr.rel (%p2844) target = $region44
      $region43: #{tpu_custom_call.1} parent=39 // pred_region
        %s2847 = smul.u32 128, %s16
      $region44: #{tpu_custom_call.1} parent=39 // pred_fallthru
        _
    $region40: #{tpu_custom_call.1} parent=5 // pred_fallthru
      _
    %p2848 = scmp.le.s32.totalorder 2, %s11
    // Predicated region
    $region45: #{tpu_custom_call.1} parent=5 // pred_check
      %p2849 = pneg %p2848
    $region46: #{tpu_custom_call.1} parent=5 // pred_check_branch
      %2851 = sbr.rel (%p2849) target = $region48
    $region47: #{tpu_custom_call.1} parent=5 // pred_region
      %s2852 = ssub.s32 %s11, 2
      // Predicated region
      $region49: #{tpu_custom_call.1} parent=47 // pred_check
        %p2853 = pneg %p150
      $region50: #{tpu_custom_call.1} parent=47 // pred_check_branch
        %2855 = sbr.rel (%p2853) target = $region52
      $region51: #{tpu_custom_call.1} parent=47 // pred_region
        %s2856 = smul.u32 128, %s17
        %p2857 = scmp.lt.s32.totalorder %s2856, 511
        %s2858 = scalar_select %p2857, %s2856, 511
        %s2859 = smul.addr %s2858, 8
        %s2860 = scalar_lea.vmem %s5, %s2859
      $region52: #{tpu_custom_call.1} parent=47 // pred_fallthru
        _
    $region48: #{tpu_custom_call.1} parent=5 // pred_fallthru
      _
  $region6: #{tpu_custom_call.1} parent=0 // loop_footer
    %s15 = sadd.s32 1, %s11
  $region7: #{tpu_custom_call.1} parent=0 // loop_footer_branch
    %10 = sbr.rel target = $region3
  $region8: #{tpu_custom_call.1} parent=0 // loop_exit
    _

</llo_original>
